<compile_context>
chip_gen: v6e
topology: v6e:2x2x1
jax: 0.10.0
libtpu: 0.0.40
codegen_flags: <defaults>
</compile_context>

<pallas_src>
import jax
import jax.numpy as jnp
from jax.experimental import pallas as pl
from jax.experimental.pallas import tpu as pltpu


_ROWS = 40  # padded per-sample row count (36 valid rows = 6x6 conv2/conv3 grid)


# ----------------------------- Pallas kernel ------------------------------ #

def _dqn_fused_kernel(p_ref, w1_ref, b1_ref, w2_ref, b2_ref, w3_ref, b3_ref,
                      wl_ref, bfc_ref, o_ref, x1_ref, x2_ref, x3_ref):
    """Whole DQN forward for one batch block; activations stay in VMEM."""
    f32 = jnp.float32
    cdt = w1_ref.dtype                 # MXU operand dtype (f32 default, bf16 opt)
    L = p_ref.shape[0]                 # BB * 40 rows in this block
    bb = L // _ROWS
    nc = o_ref.shape[-1]

    # ---- conv1 (2x2, s1, p1) + BN1 + ReLU: ONE (L,128)@(128,256) matmul ----
    # Patch lanes are (parity group g)*32 + im2col channel; W1 is block-diag,
    # so each parity group's conv1 output lands in its own 64-lane slice.
    y1 = jnp.dot(p_ref[...].astype(cdt), w1_ref[...], preferred_element_type=f32)
    x1_ref[...] = jnp.maximum(y1 + b1_ref[...], 0.0)                    # (L, 256)

    # ---- conv2 (2x2, s2) + BN2 + ReLU: ONE matmul ----
    # Contraction over 256 = 4 parity groups x 64 channels sums the 4 taps.
    y2 = jnp.dot(x1_ref[...].astype(cdt), w2_ref[...], preferred_element_type=f32)
    x2_ref[pl.ds(0, L), :] = jnp.maximum(y2 + b2_ref[...], 0.0)         # (L, 32)
    x2_ref[pl.ds(L, 8), :] = jnp.zeros((8, x2_ref.shape[1]), f32)       # zero tail

    # ---- conv3 (2x2, s1, 6x6 -> 5x5) + BN3 + ReLU: 4 full-tile matmuls ----
    # Per-sample rows are padded to 40, so tap (ki,kj) is just a row-shifted
    # read of x2 at offset ki*6+kj in {0,1,6,7}.  Invalid / padding rows of
    # the result are masked later by the zero-padded Linear weight.
    for k, off in enumerate((0, 1, 6, 7)):
        tap = jnp.dot(x2_ref[pl.ds(off, L), :].astype(cdt), w3_ref[k],
                      preferred_element_type=f32)
        if k == 0:
            x3_ref[...] = tap
        else:
            x3_ref[...] += tap
    x3_ref[...] = jnp.maximum(x3_ref[...] + b3_ref[...], 0.0)           # (L, 16)

    # ---- Linear(400 -> nc), vectorized over the whole batch block ----
    # wl is pre-laid-out as (nc, 40, 16) with zeros on the 15 invalid/padding
    # rows, so out[b, n] = sum_{r,c} x3[b, r, c] * wl[n, r, c] + bias.
    cols = []
    for n in range(nc):
        prod = x3_ref[...].reshape(bb, _ROWS, 16) * wl_ref[n]           # (bb,40,16)
        s = jnp.sum(jnp.sum(prod, axis=-1), axis=-1, keepdims=True)     # (bb,1)
        cols.append(s)
    o_ref[...] = (jnp.concatenate(cols, axis=-1)
                  + bfc_ref[...]).astype(o_ref.dtype)                   # (bb, nc)


def _dqn_pallas(patches_2d, kp, bb, n_blocks):
    """patches_2d: (B_pad*40, 128) parity/lane-packed conv1 im2col."""
    nc = kp['bfc'].shape[-1]
    L = bb * _ROWS
    out = pl.pallas_call(
        _dqn_fused_kernel,
        out_shape=jax.ShapeDtypeStruct((n_blocks * bb, nc), jnp.float32),
        grid=(n_blocks,),
        in_specs=[
            pl.BlockSpec((L, 128), lambda i: (i, 0)),          # patches block
            pl.BlockSpec((128, 256), lambda i: (0, 0)),        # W1 block-diag
            pl.BlockSpec((1, 256), lambda i: (0, 0)),          # b1 (tiled x4)
            pl.BlockSpec((256, 32), lambda i: (0, 0)),         # W2 tap-stacked
            pl.BlockSpec((1, 32), lambda i: (0, 0)),           # b2
            pl.BlockSpec((4, 32, 16), lambda i: (0, 0, 0)),    # W3 taps
            pl.BlockSpec((1, 16), lambda i: (0, 0)),           # b3
            pl.BlockSpec((nc, _ROWS, 16), lambda i: (0, 0, 0)),  # Linear W (padded)
            pl.BlockSpec((1, nc), lambda i: (0, 0)),           # Linear bias
        ],
        out_specs=pl.BlockSpec((bb, nc), lambda i: (i, 0)),
        scratch_shapes=[
            pltpu.VMEM((L, 256), jnp.float32),                 # conv1 output
            pltpu.VMEM((L + 8, 32), jnp.float32),              # conv2 output (+tail)
            pltpu.VMEM((L, 16), jnp.float32),                  # conv3 output
        ],
        compiler_params=pltpu.CompilerParams(
            dimension_semantics=("parallel",)),
        # NOTE: at block_b=64 total VMEM use is ~8 MiB; for block_b>=256 on
        # v5e/v6e, pass vmem_limit_bytes explicitly.
    )(patches_2d, kp['w1bd'], kp['b1'], kp['w2'], kp['b2'],
      kp['w3'], kp['b3'], kp['wl'], kp['bfc'])
    return out


# ------------------------------- JAX glue ---------------------------------- #

def _conv1_patches(x_nchw):
    """(B,8,11,11) NCHW -> (B,40,128) conv1 im2col.

    Row r = p*6 + q (36 valid rows + 4 zero rows per sample); lane =
    g*32 + (ki*2+kj)*8 + cin where g = di*2+dj is the conv1-output parity
    group, so conv1 output (2p+di, 2q+dj) lives at (row r, lane group g)."""
    B = x_nchw.shape[0]
    x = jnp.transpose(x_nchw, (0, 2, 3, 1))                    # (B,11,11,8)
    xp = jnp.pad(x, ((0, 0), (1, 1), (1, 1), (0, 0)))          # (B,13,13,8)
    taps = [xp[:, ki:ki + 12, kj:kj + 12, :]
            for ki in range(2) for kj in range(2)]
    p = jnp.concatenate(taps, axis=-1)                         # (B,12,12,32)
    p = p.reshape(B, 6, 2, 6, 2, 32)                           # (B,p,di,q,dj,C)
    p = jnp.transpose(p, (0, 1, 3, 2, 4, 5))                   # (B,p,q,di,dj,C)
    p = p.reshape(B, 36, 128)
    return jnp.pad(p, ((0, 0), (0, _ROWS - 36), (0, 0)))       # (B,40,128)


def prepare_kernel_params(params, *, eps=1e-5, mxu_dtype=jnp.float32):
    """One-time prep: fold BN scales, build block-diag / tap-stacked weights.

    Use mxu_dtype=jnp.bfloat16 on v6e/v7x for large batches (f32 accumulate;
    loosen the reference tolerance if enabling it)."""
    def fold(conv_b, bn):
        gamma, beta, mean, var = bn
        scale = gamma / jnp.sqrt(var + eps)
        return scale, beta + (conv_b - mean) * scale

    def conv_taps(w):  # PyTorch (cout,cin,2,2) -> (4,cin,cout), tap = ki*2+kj
        cout, cin = w.shape[0], w.shape[1]
        return jnp.transpose(w, (2, 3, 1, 0)).reshape(4, cin, cout)

    s1, b1 = fold(params['b1'], params['bn1'])
    s2, b2 = fold(params['b2'], params['bn2'])
    s3, b3 = fold(params['b3'], params['bn3'])

    w1 = (conv_taps(params['w1']) * s1[None, None, :]).reshape(32, 64)
    w1bd = jnp.kron(jnp.eye(4, dtype=w1.dtype), w1)            # (128,256) blk-diag
    b1big = jnp.tile(b1, 4).reshape(1, 256)

    w2 = (conv_taps(params['w2']) * s2[None, None, :]).reshape(256, 32)
    w3 = conv_taps(params['w3']) * s3[None, None, :]           # (4,32,16)

    wfc = params['wfc']
    nc = wfc.shape[0]
    # PyTorch NCHW flatten (c*25 + i*5 + j) -> padded (n, i*6+j, c) layout with
    # zeros on the j=5 / i=5 / padding rows so the kernel can ignore them.
    w = jnp.transpose(wfc.reshape(nc, 16, 5, 5), (0, 2, 3, 1))        # (n,5,5,16)
    wl = jnp.zeros((nc, 6, 6, 16), w.dtype).at[:, :5, :5, :].set(w)
    wl = jnp.pad(wl.reshape(nc, 36, 16), ((0, 0), (0, _ROWS - 36), (0, 0)))

    return dict(
        w1bd=w1bd.astype(mxu_dtype), b1=b1big.astype(jnp.float32),
        w2=w2.astype(mxu_dtype),     b2=b2.reshape(1, 32).astype(jnp.float32),
        w3=w3.astype(mxu_dtype),     b3=b3.reshape(1, 16).astype(jnp.float32),
        wl=wl.astype(jnp.float32),   # VPU operand: keep f32 (v5e-safe)
        bfc=params['bfc'].reshape(1, nc).astype(jnp.float32),
    )


def dqn_forward(x_nchw, kparams, *, block_b=64):
    assert x_nchw.shape[1:] == (8, 11, 11), "Linear(400=16*5*5) implies 8x11x11"
    B = x_nchw.shape[0]
    bb = max(1, min(block_b, B))
    n_blocks = -(-B // bb)
    B_pad = n_blocks * bb
    patches = _conv1_patches(x_nchw).astype(kparams['w1bd'].dtype)
    if B_pad != B:
        patches = jnp.pad(patches, ((0, B_pad - B), (0, 0), (0, 0)))
    patches = patches.reshape(B_pad * _ROWS, 128)
    out = _dqn_pallas(patches, kparams, bb, n_blocks)
    return out[:B]


def init_params(key, num_classes=4):
    ks = iter(jax.random.split(key, 20))

    def conv_init(cout, cin):
        w = 0.1 * jax.random.normal(next(ks), (cout, cin, 2, 2), jnp.float32)
        b = 0.1 * jax.random.normal(next(ks), (cout,), jnp.float32)
        return w, b

    def bn_init(c):
        gamma = 1.0 + 0.1 * jax.random.normal(next(ks), (c,), jnp.float32)
        beta = 0.1 * jax.random.normal(next(ks), (c,), jnp.float32)
        mean = 0.1 * jax.random.normal(next(ks), (c,), jnp.float32)
        var = 0.5 + jax.random.uniform(next(ks), (c,), jnp.float32)
        return (gamma, beta, mean, var)

    w1, b1 = conv_init(64, 8);  bn1 = bn_init(64)
    w2, b2 = conv_init(32, 64); bn2 = bn_init(32)
    w3, b3 = conv_init(16, 32); bn3 = bn_init(16)
    wfc = 0.05 * jax.random.normal(next(ks), (num_classes, 400), jnp.float32)
    bfc = 0.05 * jax.random.normal(next(ks), (num_classes,), jnp.float32)
    return dict(w1=w1, b1=b1, bn1=bn1, w2=w2, b2=b2, bn2=bn2,
                w3=w3, b3=b3, bn3=bn3, wfc=wfc, bfc=bfc)


# ------------------------- pure-JAX reference ------------------------------ #

def dqn_reference(x_nchw, params):
    x = jnp.transpose(x_nchw, (0, 2, 3, 1))

    def conv_bn_relu(x, w, b, bn, stride, padding):
        w_hwio = jnp.transpose(w, (2, 3, 1, 0))
        y = jax.lax.conv_general_dilated(
            x, w_hwio, window_strides=(stride, stride), padding=padding,
            dimension_numbers=('NHWC', 'HWIO', 'NHWC'))
        y = y + b
        gamma, beta, mean, var = bn
        y = gamma * (y - mean) / jnp.sqrt(var + 1e-5) + beta
        return jnp.maximum(y, 0.0)

    x = conv_bn_relu(x, params['w1'], params['b1'], params['bn1'], 1,
                     ((1, 1), (1, 1)))
    x = conv_bn_relu(x, params['w2'], params['b2'], params['bn2'], 2, 'VALID')
    x = conv_bn_relu(x, params['w3'], params['b3'], params['bn3'], 1, 'VALID')
    x = jnp.transpose(x, (0, 3, 1, 2)).reshape(x.shape[0], -1)  # NCHW flatten
    return x @ params['wfc'].T + params['bfc']


# --------------------------------- main ------------------------------------ #

if __name__ == "__main__":
    key = jax.random.PRNGKey(0)
    kx, kx2, kpk = jax.random.split(key, 3)

    params = init_params(kpk, num_classes=4)
    kparams = prepare_kernel_params(params)              # one-time weight prep

    fwd = jax.jit(dqn_forward, static_argnames=("block_b",))

    # Small sanity shape (single batch block).
    B = 2
    x = jax.random.normal(kx, (B, 8, 11, 11), jnp.float32)
    out = jax.block_until_ready(fwd(x, kparams, block_b=2))
    assert out.shape == (B, 4)
    ref = dqn_reference(x, params)
    if not jnp.allclose(out, ref, rtol=1e-3, atol=1e-3):
        raise AssertionError(f"Pallas/reference mismatch (B=2):\n{out}\nvs\n{ref}")

    # Multi-block grid + batch-padding path (3 blocks of 8, last one padded).
    B2 = 19
    x2 = jax.random.normal(kx2, (B2, 8, 11, 11), jnp.float32)
    out2 = jax.block_until_ready(fwd(x2, kparams, block_b=8))
    ref2 = dqn_reference(x2, params)
    if not jnp.allclose(out2, ref2, rtol=1e-3, atol=1e-3):
        raise AssertionError("Pallas/reference mismatch (B=19, block_b=8)")

    print("KERNEL_OK")
</pallas_src>

<mosaic_0001>
module attributes {stable_mosaic.version = 11 : i64} {
  func.func @_dqn_fused_kernel(%arg0: i32, %arg1: memref<80x128xf32, #tpu.memory_space<vmem>>, %arg2: memref<128x256xf32, #tpu.memory_space<vmem>>, %arg3: memref<1x256xf32, #tpu.memory_space<vmem>>, %arg4: memref<256x32xf32, #tpu.memory_space<vmem>>, %arg5: memref<1x32xf32, #tpu.memory_space<vmem>>, %arg6: memref<4x32x16xf32, #tpu.memory_space<vmem>>, %arg7: memref<1x16xf32, #tpu.memory_space<vmem>>, %arg8: memref<4x40x16xf32, #tpu.memory_space<vmem>>, %arg9: memref<1x4xf32, #tpu.memory_space<vmem>>, %arg10: memref<2x4xf32, #tpu.memory_space<vmem>>, %arg11: memref<80x256xf32, #tpu.memory_space<vmem>>, %arg12: memref<88x32xf32, #tpu.memory_space<vmem>>, %arg13: memref<80x16xf32, #tpu.memory_space<vmem>>) attributes {dimension_semantics = [#tpu.dimension_semantics<parallel>], iteration_bounds = array<i64: 1>, scalar_prefetch = 0 : i64, scratch_operands = 3 : i64, tpu.core_type = #tpu.core_type<tc>, window_params = [{transform_indices = @transform_0, window_bounds = array<i64: 80, 128>}, {pipeline_mode = #tpu.pipeline_mode<synchronous>, transform_indices = @transform_1, window_bounds = array<i64: 128, 256>}, {pipeline_mode = #tpu.pipeline_mode<synchronous>, transform_indices = @transform_2, window_bounds = array<i64: 1, 256>}, {pipeline_mode = #tpu.pipeline_mode<synchronous>, transform_indices = @transform_3, window_bounds = array<i64: 256, 32>}, {pipeline_mode = #tpu.pipeline_mode<synchronous>, transform_indices = @transform_4, window_bounds = array<i64: 1, 32>}, {pipeline_mode = #tpu.pipeline_mode<synchronous>, transform_indices = @transform_5, window_bounds = array<i64: 4, 32, 16>}, {pipeline_mode = #tpu.pipeline_mode<synchronous>, transform_indices = @transform_6, window_bounds = array<i64: 1, 16>}, {pipeline_mode = #tpu.pipeline_mode<synchronous>, transform_indices = @transform_7, window_bounds = array<i64: 4, 40, 16>}, {pipeline_mode = #tpu.pipeline_mode<synchronous>, transform_indices = @transform_8, window_bounds = array<i64: 1, 4>}, {transform_indices = @transform_9, window_bounds = array<i64: 2, 4>}]} {
    %c0 = arith.constant 0 : index
    %c0_0 = arith.constant 0 : index
    %0 = vector.load %arg1[%c0, %c0_0] : memref<80x128xf32, #tpu.memory_space<vmem>>, vector<80x128xf32>
    %c0_1 = arith.constant 0 : index
    %c0_2 = arith.constant 0 : index
    %1 = vector.load %arg2[%c0_1, %c0_2] : memref<128x256xf32, #tpu.memory_space<vmem>>, vector<128x256xf32>
    %cst = arith.constant dense<0.000000e+00> : vector<80x256xf32>
    %2 = tpu.matmul %0, %1, %cst {dimension_numbers = #tpu.dot_dimension_numbers<[1], [0], [0], [1], [0, 0, 1, 1], [], []>} : vector<80x128xf32>, vector<128x256xf32>, vector<80x256xf32> -> vector<80x256xf32>
    %c0_3 = arith.constant 0 : index
    %c0_4 = arith.constant 0 : index
    %3 = vector.load %arg3[%c0_3, %c0_4] : memref<1x256xf32, #tpu.memory_space<vmem>>, vector<1x256xf32>
    %4 = vector.broadcast %3 : vector<1x256xf32> to vector<80x256xf32>
    %5 = arith.addf %2, %4 : vector<80x256xf32>
    %cst_5 = arith.constant 0.000000e+00 : f32
    %6 = vector.broadcast %cst_5 : f32 to vector<80x256xf32>
    %7 = arith.maximumf %5, %6 : vector<80x256xf32>
    %c0_6 = arith.constant 0 : index
    %c0_7 = arith.constant 0 : index
    %8 = vector.load %arg11[%c0_6, %c0_7] : memref<80x256xf32, #tpu.memory_space<vmem>>, vector<80x256xf32>
    tpu.vector_store %arg11[%c0_6, %c0_7], %7 {strides = array<i32>} : memref<80x256xf32, #tpu.memory_space<vmem>>, vector<80x256xf32>,
    %c0_8 = arith.constant 0 : index
    %c0_9 = arith.constant 0 : index
    %9 = vector.load %arg11[%c0_8, %c0_9] : memref<80x256xf32, #tpu.memory_space<vmem>>, vector<80x256xf32>
    %c0_10 = arith.constant 0 : index
    %c0_11 = arith.constant 0 : index
    %10 = vector.load %arg4[%c0_10, %c0_11] : memref<256x32xf32, #tpu.memory_space<vmem>>, vector<256x32xf32>
    %cst_12 = arith.constant dense<0.000000e+00> : vector<80x32xf32>
    %11 = tpu.matmul %9, %10, %cst_12 {dimension_numbers = #tpu.dot_dimension_numbers<[1], [0], [0], [1], [0, 0, 1, 1], [], []>} : vector<80x256xf32>, vector<256x32xf32>, vector<80x32xf32> -> vector<80x32xf32>
    %c0_13 = arith.constant 0 : index
    %c0_14 = arith.constant 0 : index
    %12 = vector.load %arg5[%c0_13, %c0_14] : memref<1x32xf32, #tpu.memory_space<vmem>>, vector<1x32xf32>
    %13 = vector.broadcast %12 : vector<1x32xf32> to vector<80x32xf32>
    %14 = arith.addf %11, %13 : vector<80x32xf32>
    %cst_15 = arith.constant 0.000000e+00 : f32
    %15 = vector.broadcast %cst_15 : f32 to vector<80x32xf32>
    %16 = arith.maximumf %14, %15 : vector<80x32xf32>
    %c0_16 = arith.constant 0 : index
    %c0_17 = arith.constant 0 : index
    %17 = vector.load %arg12[%c0_16, %c0_17] : memref<88x32xf32, #tpu.memory_space<vmem>>, vector<80x32xf32>
    tpu.vector_store %arg12[%c0_16, %c0_17], %16 {strides = array<i32>} : memref<88x32xf32, #tpu.memory_space<vmem>>, vector<80x32xf32>,
    %cst_18 = arith.constant 0.000000e+00 : f32
    %18 = vector.broadcast %cst_18 : f32 to vector<8x32xf32>
    %c80 = arith.constant 80 : index
    %c0_19 = arith.constant 0 : index
    %19 = vector.load %arg12[%c80, %c0_19] : memref<88x32xf32, #tpu.memory_space<vmem>>, vector<8x32xf32>
    tpu.vector_store %arg12[%c80, %c0_19], %18 {strides = array<i32>} : memref<88x32xf32, #tpu.memory_space<vmem>>, vector<8x32xf32>,
    %c0_20 = arith.constant 0 : index
    %c0_21 = arith.constant 0 : index
    %20 = vector.load %arg12[%c0_20, %c0_21] : memref<88x32xf32, #tpu.memory_space<vmem>>, vector<80x32xf32>
    %c0_22 = arith.constant 0 : index
    %c0_23 = arith.constant 0 : index
    %c0_24 = arith.constant 0 : index
    %21 = vector.load %arg6[%c0_22, %c0_23, %c0_24] : memref<4x32x16xf32, #tpu.memory_space<vmem>>, vector<1x32x16xf32>
    %22 = vector.shape_cast %21 : vector<1x32x16xf32> to vector<32x16xf32>
    %cst_25 = arith.constant dense<0.000000e+00> : vector<80x16xf32>
    %23 = tpu.matmul %20, %22, %cst_25 {dimension_numbers = #tpu.dot_dimension_numbers<[1], [0], [0], [1], [0, 0, 1, 1], [], []>} : vector<80x32xf32>, vector<32x16xf32>, vector<80x16xf32> -> vector<80x16xf32>
    %c0_26 = arith.constant 0 : index
    %c0_27 = arith.constant 0 : index
    %24 = vector.load %arg13[%c0_26, %c0_27] : memref<80x16xf32, #tpu.memory_space<vmem>>, vector<80x16xf32>
    tpu.vector_store %arg13[%c0_26, %c0_27], %23 {strides = array<i32>} : memref<80x16xf32, #tpu.memory_space<vmem>>, vector<80x16xf32>,
    %c1 = arith.constant 1 : index
    %c0_28 = arith.constant 0 : index
    %25 = vector.load %arg12[%c1, %c0_28] : memref<88x32xf32, #tpu.memory_space<vmem>>, vector<80x32xf32>
    %c1_29 = arith.constant 1 : index
    %c0_30 = arith.constant 0 : index
    %c0_31 = arith.constant 0 : index
    %26 = vector.load %arg6[%c1_29, %c0_30, %c0_31] : memref<4x32x16xf32, #tpu.memory_space<vmem>>, vector<1x32x16xf32>
    %27 = vector.shape_cast %26 : vector<1x32x16xf32> to vector<32x16xf32>
    %cst_32 = arith.constant dense<0.000000e+00> : vector<80x16xf32>
    %28 = tpu.matmul %25, %27, %cst_32 {dimension_numbers = #tpu.dot_dimension_numbers<[1], [0], [0], [1], [0, 0, 1, 1], [], []>} : vector<80x32xf32>, vector<32x16xf32>, vector<80x16xf32> -> vector<80x16xf32>
    %c0_33 = arith.constant 0 : index
    %c0_34 = arith.constant 0 : index
    %29 = vector.load %arg13[%c0_33, %c0_34] : memref<80x16xf32, #tpu.memory_space<vmem>>, vector<80x16xf32>
    %30 = arith.addf %29, %28 : vector<80x16xf32>
    %c0_35 = arith.constant 0 : index
    %c0_36 = arith.constant 0 : index
    %31 = vector.load %arg13[%c0_35, %c0_36] : memref<80x16xf32, #tpu.memory_space<vmem>>, vector<80x16xf32>
    tpu.vector_store %arg13[%c0_35, %c0_36], %30 {strides = array<i32>} : memref<80x16xf32, #tpu.memory_space<vmem>>, vector<80x16xf32>,
    %c6 = arith.constant 6 : index
    %c0_37 = arith.constant 0 : index
    %32 = vector.load %arg12[%c6, %c0_37] : memref<88x32xf32, #tpu.memory_space<vmem>>, vector<80x32xf32>
    %c2 = arith.constant 2 : index
    %c0_38 = arith.constant 0 : index
    %c0_39 = arith.constant 0 : index
    %33 = vector.load %arg6[%c2, %c0_38, %c0_39] : memref<4x32x16xf32, #tpu.memory_space<vmem>>, vector<1x32x16xf32>
    %34 = vector.shape_cast %33 : vector<1x32x16xf32> to vector<32x16xf32>
    %cst_40 = arith.constant dense<0.000000e+00> : vector<80x16xf32>
    %35 = tpu.matmul %32, %34, %cst_40 {dimension_numbers = #tpu.dot_dimension_numbers<[1], [0], [0], [1], [0, 0, 1, 1], [], []>} : vector<80x32xf32>, vector<32x16xf32>, vector<80x16xf32> -> vector<80x16xf32>
    %c0_41 = arith.constant 0 : index
    %c0_42 = arith.constant 0 : index
    %36 = vector.load %arg13[%c0_41, %c0_42] : memref<80x16xf32, #tpu.memory_space<vmem>>, vector<80x16xf32>
    %37 = arith.addf %36, %35 : vector<80x16xf32>
    %c0_43 = arith.constant 0 : index
    %c0_44 = arith.constant 0 : index
    %38 = vector.load %arg13[%c0_43, %c0_44] : memref<80x16xf32, #tpu.memory_space<vmem>>, vector<80x16xf32>
    tpu.vector_store %arg13[%c0_43, %c0_44], %37 {strides = array<i32>} : memref<80x16xf32, #tpu.memory_space<vmem>>, vector<80x16xf32>,
    %c7 = arith.constant 7 : index
    %c0_45 = arith.constant 0 : index
    %39 = vector.load %arg12[%c7, %c0_45] : memref<88x32xf32, #tpu.memory_space<vmem>>, vector<80x32xf32>
    %c3 = arith.constant 3 : index
    %c0_46 = arith.constant 0 : index
    %c0_47 = arith.constant 0 : index
    %40 = vector.load %arg6[%c3, %c0_46, %c0_47] : memref<4x32x16xf32, #tpu.memory_space<vmem>>, vector<1x32x16xf32>
    %41 = vector.shape_cast %40 : vector<1x32x16xf32> to vector<32x16xf32>
    %cst_48 = arith.constant dense<0.000000e+00> : vector<80x16xf32>
    %42 = tpu.matmul %39, %41, %cst_48 {dimension_numbers = #tpu.dot_dimension_numbers<[1], [0], [0], [1], [0, 0, 1, 1], [], []>} : vector<80x32xf32>, vector<32x16xf32>, vector<80x16xf32> -> vector<80x16xf32>
    %c0_49 = arith.constant 0 : index
    %c0_50 = arith.constant 0 : index
    %43 = vector.load %arg13[%c0_49, %c0_50] : memref<80x16xf32, #tpu.memory_space<vmem>>, vector<80x16xf32>
    %44 = arith.addf %43, %42 : vector<80x16xf32>
    %c0_51 = arith.constant 0 : index
    %c0_52 = arith.constant 0 : index
    %45 = vector.load %arg13[%c0_51, %c0_52] : memref<80x16xf32, #tpu.memory_space<vmem>>, vector<80x16xf32>
    tpu.vector_store %arg13[%c0_51, %c0_52], %44 {strides = array<i32>} : memref<80x16xf32, #tpu.memory_space<vmem>>, vector<80x16xf32>,
    %c0_53 = arith.constant 0 : index
    %c0_54 = arith.constant 0 : index
    %46 = vector.load %arg13[%c0_53, %c0_54] : memref<80x16xf32, #tpu.memory_space<vmem>>, vector<80x16xf32>
    %c0_55 = arith.constant 0 : index
    %c0_56 = arith.constant 0 : index
    %47 = vector.load %arg7[%c0_55, %c0_56] : memref<1x16xf32, #tpu.memory_space<vmem>>, vector<1x16xf32>
    %48 = vector.broadcast %47 : vector<1x16xf32> to vector<80x16xf32>
    %49 = arith.addf %46, %48 : vector<80x16xf32>
    %cst_57 = arith.constant 0.000000e+00 : f32
    %50 = vector.broadcast %cst_57 : f32 to vector<80x16xf32>
    %51 = arith.maximumf %49, %50 : vector<80x16xf32>
    %c0_58 = arith.constant 0 : index
    %c0_59 = arith.constant 0 : index
    %52 = vector.load %arg13[%c0_58, %c0_59] : memref<80x16xf32, #tpu.memory_space<vmem>>, vector<80x16xf32>
    tpu.vector_store %arg13[%c0_58, %c0_59], %51 {strides = array<i32>} : memref<80x16xf32, #tpu.memory_space<vmem>>, vector<80x16xf32>,
    %c0_60 = arith.constant 0 : index
    %c0_61 = arith.constant 0 : index
    %53 = vector.load %arg13[%c0_60, %c0_61] : memref<80x16xf32, #tpu.memory_space<vmem>>, vector<80x16xf32>
    %54 = vector.shape_cast %53 : vector<80x16xf32> to vector<2x40x16xf32>
    %c0_62 = arith.constant 0 : index
    %c0_63 = arith.constant 0 : index
    %c0_64 = arith.constant 0 : index
    %55 = vector.load %arg8[%c0_62, %c0_63, %c0_64] : memref<4x40x16xf32, #tpu.memory_space<vmem>>, vector<1x40x16xf32>
    %56 = vector.shape_cast %55 : vector<1x40x16xf32> to vector<40x16xf32>
    %57 = vector.shape_cast %56 : vector<40x16xf32> to vector<1x40x16xf32>
    %58 = vector.broadcast %57 : vector<1x40x16xf32> to vector<2x40x16xf32>
    %59 = arith.mulf %54, %58 : vector<2x40x16xf32>
    %cst_65 = arith.constant dense<0.000000e+00> : vector<2x40xf32>
    %60 = vector.multi_reduction <add>, %59, %cst_65 [2] : vector<2x40x16xf32> to vector<2x40xf32>
    %cst_66 = arith.constant dense<0.000000e+00> : vector<2xf32>
    %61 = vector.multi_reduction <add>, %60, %cst_66 [1] : vector<2x40xf32> to vector<2xf32>
    %62 = vector.shape_cast %61 : vector<2xf32> to vector<2x1xf32>
    %c0_67 = arith.constant 0 : index
    %c0_68 = arith.constant 0 : index
    %63 = vector.load %arg13[%c0_67, %c0_68] : memref<80x16xf32, #tpu.memory_space<vmem>>, vector<80x16xf32>
    %64 = vector.shape_cast %63 : vector<80x16xf32> to vector<2x40x16xf32>
    %c1_69 = arith.constant 1 : index
    %c0_70 = arith.constant 0 : index
    %c0_71 = arith.constant 0 : index
    %65 = vector.load %arg8[%c1_69, %c0_70, %c0_71] : memref<4x40x16xf32, #tpu.memory_space<vmem>>, vector<1x40x16xf32>
    %66 = vector.shape_cast %65 : vector<1x40x16xf32> to vector<40x16xf32>
    %67 = vector.shape_cast %66 : vector<40x16xf32> to vector<1x40x16xf32>
    %68 = vector.broadcast %67 : vector<1x40x16xf32> to vector<2x40x16xf32>
    %69 = arith.mulf %64, %68 : vector<2x40x16xf32>
    %cst_72 = arith.constant dense<0.000000e+00> : vector<2x40xf32>
    %70 = vector.multi_reduction <add>, %69, %cst_72 [2] : vector<2x40x16xf32> to vector<2x40xf32>
    %cst_73 = arith.constant dense<0.000000e+00> : vector<2xf32>
    %71 = vector.multi_reduction <add>, %70, %cst_73 [1] : vector<2x40xf32> to vector<2xf32>
    %72 = vector.shape_cast %71 : vector<2xf32> to vector<2x1xf32>
    %c0_74 = arith.constant 0 : index
    %c0_75 = arith.constant 0 : index
    %73 = vector.load %arg13[%c0_74, %c0_75] : memref<80x16xf32, #tpu.memory_space<vmem>>, vector<80x16xf32>
    %74 = vector.shape_cast %73 : vector<80x16xf32> to vector<2x40x16xf32>
    %c2_76 = arith.constant 2 : index
    %c0_77 = arith.constant 0 : index
    %c0_78 = arith.constant 0 : index
    %75 = vector.load %arg8[%c2_76, %c0_77, %c0_78] : memref<4x40x16xf32, #tpu.memory_space<vmem>>, vector<1x40x16xf32>
    %76 = vector.shape_cast %75 : vector<1x40x16xf32> to vector<40x16xf32>
    %77 = vector.shape_cast %76 : vector<40x16xf32> to vector<1x40x16xf32>
    %78 = vector.broadcast %77 : vector<1x40x16xf32> to vector<2x40x16xf32>
    %79 = arith.mulf %74, %78 : vector<2x40x16xf32>
    %cst_79 = arith.constant dense<0.000000e+00> : vector<2x40xf32>
    %80 = vector.multi_reduction <add>, %79, %cst_79 [2] : vector<2x40x16xf32> to vector<2x40xf32>
    %cst_80 = arith.constant dense<0.000000e+00> : vector<2xf32>
    %81 = vector.multi_reduction <add>, %80, %cst_80 [1] : vector<2x40xf32> to vector<2xf32>
    %82 = vector.shape_cast %81 : vector<2xf32> to vector<2x1xf32>
    %c0_81 = arith.constant 0 : index
    %c0_82 = arith.constant 0 : index
    %83 = vector.load %arg13[%c0_81, %c0_82] : memref<80x16xf32, #tpu.memory_space<vmem>>, vector<80x16xf32>
    %84 = vector.shape_cast %83 : vector<80x16xf32> to vector<2x40x16xf32>
    %c3_83 = arith.constant 3 : index
    %c0_84 = arith.constant 0 : index
    %c0_85 = arith.constant 0 : index
    %85 = vector.load %arg8[%c3_83, %c0_84, %c0_85] : memref<4x40x16xf32, #tpu.memory_space<vmem>>, vector<1x40x16xf32>
    %86 = vector.shape_cast %85 : vector<1x40x16xf32> to vector<40x16xf32>
    %87 = vector.shape_cast %86 : vector<40x16xf32> to vector<1x40x16xf32>
    %88 = vector.broadcast %87 : vector<1x40x16xf32> to vector<2x40x16xf32>
    %89 = arith.mulf %84, %88 : vector<2x40x16xf32>
    %cst_86 = arith.constant dense<0.000000e+00> : vector<2x40xf32>
    %90 = vector.multi_reduction <add>, %89, %cst_86 [2] : vector<2x40x16xf32> to vector<2x40xf32>
    %cst_87 = arith.constant dense<0.000000e+00> : vector<2xf32>
    %91 = vector.multi_reduction <add>, %90, %cst_87 [1] : vector<2x40xf32> to vector<2xf32>
    %92 = vector.shape_cast %91 : vector<2xf32> to vector<2x1xf32>
    %93 = tpu.concatenate %62, %72, %82, %92 in 1 : vector<2x1xf32>, vector<2x1xf32>, vector<2x1xf32>, vector<2x1xf32> -> vector<2x4xf32>
    %c0_88 = arith.constant 0 : index
    %c0_89 = arith.constant 0 : index
    %94 = vector.load %arg9[%c0_88, %c0_89] : memref<1x4xf32, #tpu.memory_space<vmem>>, vector<1x4xf32>
    %95 = vector.broadcast %94 : vector<1x4xf32> to vector<2x4xf32>
    %96 = arith.addf %93, %95 : vector<2x4xf32>
    %c0_90 = arith.constant 0 : index
    %c0_91 = arith.constant 0 : index
    %97 = vector.load %arg10[%c0_90, %c0_91] : memref<2x4xf32, #tpu.memory_space<vmem>>, vector<2x4xf32>
    tpu.vector_store %arg10[%c0_90, %c0_91], %96 {strides = array<i32>} : memref<2x4xf32, #tpu.memory_space<vmem>>, vector<2x4xf32>,
    return
  }
  func.func @transform_0(%arg0: i32) -> (i32, i32) {
    %c0_i32 = arith.constant 0 : i32
    %c0_i32_0 = arith.constant 0 : i32
    return %arg0, %c0_i32 : i32, i32
  }
  func.func @transform_1(%arg0: i32) -> (i32, i32) {
    %c0_i32 = arith.constant 0 : i32
    %c0_i32_0 = arith.constant 0 : i32
    %c0_i32_1 = arith.constant 0 : i32
    return %c0_i32, %c0_i32_0 : i32, i32
  }
  func.func @transform_2(%arg0: i32) -> (i32, i32) {
    %c0_i32 = arith.constant 0 : i32
    %c0_i32_0 = arith.constant 0 : i32
    %c0_i32_1 = arith.constant 0 : i32
    return %c0_i32, %c0_i32_0 : i32, i32
  }
  func.func @transform_3(%arg0: i32) -> (i32, i32) {
    %c0_i32 = arith.constant 0 : i32
    %c0_i32_0 = arith.constant 0 : i32
    %c0_i32_1 = arith.constant 0 : i32
    return %c0_i32, %c0_i32_0 : i32, i32
  }
  func.func @transform_4(%arg0: i32) -> (i32, i32) {
    %c0_i32 = arith.constant 0 : i32
    %c0_i32_0 = arith.constant 0 : i32
    %c0_i32_1 = arith.constant 0 : i32
    return %c0_i32, %c0_i32_0 : i32, i32
  }
  func.func @transform_5(%arg0: i32) -> (i32, i32, i32) {
    %c0_i32 = arith.constant 0 : i32
    %c0_i32_0 = arith.constant 0 : i32
    %c0_i32_1 = arith.constant 0 : i32
    %c0_i32_2 = arith.constant 0 : i32
    return %c0_i32, %c0_i32_0, %c0_i32_1 : i32, i32, i32
  }
  func.func @transform_6(%arg0: i32) -> (i32, i32) {
    %c0_i32 = arith.constant 0 : i32
    %c0_i32_0 = arith.constant 0 : i32
    %c0_i32_1 = arith.constant 0 : i32
    return %c0_i32, %c0_i32_0 : i32, i32
  }
  func.func @transform_7(%arg0: i32) -> (i32, i32, i32) {
    %c0_i32 = arith.constant 0 : i32
    %c0_i32_0 = arith.constant 0 : i32
    %c0_i32_1 = arith.constant 0 : i32
    %c0_i32_2 = arith.constant 0 : i32
    return %c0_i32, %c0_i32_0, %c0_i32_1 : i32, i32, i32
  }
  func.func @transform_8(%arg0: i32) -> (i32, i32) {
    %c0_i32 = arith.constant 0 : i32
    %c0_i32_0 = arith.constant 0 : i32
    %c0_i32_1 = arith.constant 0 : i32
    return %c0_i32, %c0_i32_0 : i32, i32
  }
  func.func @transform_9(%arg0: i32) -> (i32, i32) {
    %c0_i32 = arith.constant 0 : i32
    %c0_i32_0 = arith.constant 0 : i32
    return %arg0, %c0_i32 : i32, i32
  }
}

</mosaic_0001>

<llo_original>
// kernel: dqn_forward.1
$region0: #{dqn_forward.1}
  #allocation0 [shape = 'u32[]', space=smem, size = 0x4, offset = 0x4, fixed_abs, tag = 'smem constant byte address 0x4 - core index']
  #allocation1 [shape = 'u32[144,128]{1,0:T(1,128)}', space=vmem, size = 0x12000, scoped, tag = 'internal scratch']
  #allocation2 [shape = 'f32[80,256]{1,0:T(8,128)}', space=vmem, size = 0x14000, scoped, tag = 'scratch operand']
  #allocation3 [shape = 'f32[88,32]{1,0:T(8,128)}', space=vmem, size = 0xb000, scoped, tag = 'scratch operand']
  #allocation4 [shape = 'f32[80,16]{1,0:T(8,128)}', space=vmem, size = 0xa000, scoped, tag = 'scratch operand']
  %s0 = inlined_call_operand.vmem [shape: f32[80,128], index: 0, kind: input, shape index: {}]
  %s1 = inlined_call_operand.vmem [shape: f32[128,256], index: 1, kind: input, shape index: {}]
  %s2 = inlined_call_operand.vmem [shape: f32[1,256], index: 2, kind: input, shape index: {}]
  %s3 = inlined_call_operand.vmem [shape: f32[256,32], index: 3, kind: input, shape index: {}]
  %s4 = inlined_call_operand.vmem [shape: f32[1,32], index: 4, kind: input, shape index: {}]
  %s5 = inlined_call_operand.vmem [shape: f32[4,32,16], index: 5, kind: input, shape index: {}]
  %s6 = inlined_call_operand.vmem [shape: f32[1,16], index: 6, kind: input, shape index: {}]
  %s7 = inlined_call_operand.vmem [shape: f32[4,40,16], index: 7, kind: input, shape index: {}]
  %s8 = inlined_call_operand.vmem [shape: f32[1,4], index: 8, kind: input, shape index: {}]
  %s9 = inlined_call_operand.hbm [shape: f32[2,4], index: 9, kind: output, shape index: {}]
  %s10 = sld [smem:[#allocation0]]
  $region46: #{dqn_forward.1} parent=0
    _
  %s12 = ssub.s32 1, %s10
  %s13 = scalar_select 0, %s12, %s10
  $region1: #{dqn_forward.1} parent=0
    #allocation5 [shape = 'u8[1024]{0}', space=vmem, size = 0x400, scoped, tag = 'output window, operand 0, single buffered']
    #allocation6 [shape = 's32[1]{0}', space=sflag, size = 0x4, scoped, tag = 'scoped memory for dqn_forward.1']
    %14 = vsyncpa [#allocation6], 0
    // Predicated region
    $region2: #{dqn_forward.1} parent=1 // pred_check
      _
    $region3: #{dqn_forward.1} parent=1 // pred_check_branch
      %16 = sbr.rel (0) target = $region5
    $region4: #{dqn_forward.1} parent=1 // pred_region
      _
    $region5: #{dqn_forward.1} parent=1 // pred_fallthru
      _
    // Predicated region
    $region6: #{dqn_forward.1} parent=1 // pred_check
      _
    $region7: #{dqn_forward.1} parent=1 // pred_check_branch
      %18 = sbr.rel (0) target = $region9
    $region8: #{dqn_forward.1} parent=1 // pred_region
      _
    $region9: #{dqn_forward.1} parent=1 // pred_fallthru
      _
    // Predicated region
    $region10: #{dqn_forward.1} parent=1 // pred_check
      _
    $region11: #{dqn_forward.1} parent=1 // pred_check_branch
      %20 = sbr.rel (0) target = $region13
    $region12: #{dqn_forward.1} parent=1 // pred_region
      _
    $region13: #{dqn_forward.1} parent=1 // pred_fallthru
      _
    // Predicated region
    $region14: #{dqn_forward.1} parent=1 // pred_check
      _
    $region15: #{dqn_forward.1} parent=1 // pred_check_branch
      %22 = sbr.rel (0) target = $region17
    $region16: #{dqn_forward.1} parent=1 // pred_region
      _
    $region17: #{dqn_forward.1} parent=1 // pred_fallthru
      _
    // Predicated region
    $region18: #{dqn_forward.1} parent=1 // pred_check
      _
    $region19: #{dqn_forward.1} parent=1 // pred_check_branch
      %24 = sbr.rel (0) target = $region21
    $region20: #{dqn_forward.1} parent=1 // pred_region
      _
    $region21: #{dqn_forward.1} parent=1 // pred_fallthru
      _
    // Predicated region
    $region22: #{dqn_forward.1} parent=1 // pred_check
      _
    $region23: #{dqn_forward.1} parent=1 // pred_check_branch
      %26 = sbr.rel (0) target = $region25
    $region24: #{dqn_forward.1} parent=1 // pred_region
      _
    $region25: #{dqn_forward.1} parent=1 // pred_fallthru
      _
    // Predicated region
    $region26: #{dqn_forward.1} parent=1 // pred_check
      _
    $region27: #{dqn_forward.1} parent=1 // pred_check_branch
      %28 = sbr.rel (0) target = $region29
    $region28: #{dqn_forward.1} parent=1 // pred_region
      _
    $region29: #{dqn_forward.1} parent=1 // pred_fallthru
      _
    // Predicated region
    $region30: #{dqn_forward.1} parent=1 // pred_check
      _
    $region31: #{dqn_forward.1} parent=1 // pred_check_branch
      %30 = sbr.rel (0) target = $region33
    $region32: #{dqn_forward.1} parent=1 // pred_region
      _
    $region33: #{dqn_forward.1} parent=1 // pred_fallthru
      _
    // Predicated region
    $region34: #{dqn_forward.1} parent=1 // pred_check
      _
    $region35: #{dqn_forward.1} parent=1 // pred_check_branch
      %32 = sbr.rel (0) target = $region37
    $region36: #{dqn_forward.1} parent=1 // pred_region
      _
    $region37: #{dqn_forward.1} parent=1 // pred_fallthru
      _
    %v33 = vld [vmem:[%s0] sm:$0xff]
    %v34 = vld [vmem:[%s0 + $0x8] sm:$0xff]
    %v35 = vld [vmem:[%s0 + $0x10] sm:$0xff]
    %v36 = vld [vmem:[%s0 + $0x18] sm:$0xff]
    %v37 = vld [vmem:[%s0 + $0x20] sm:$0xff]
    %v38 = vld [vmem:[%s0 + $0x28] sm:$0xff]
    %v39 = vld [vmem:[%s0 + $0x30] sm:$0xff]
    %v40 = vld [vmem:[%s0 + $0x38] sm:$0xff]
    %v41 = vld [vmem:[%s0 + $0x40] sm:$0xff]
    %v42 = vld [vmem:[%s0 + $0x48] sm:$0xff]
    %v43 = vld [vmem:[%s1] sm:$0xff]
    %v44 = vld [vmem:[%s1 + $0x8] sm:$0xff]
    %v45 = vld [vmem:[%s1 + $0x10] sm:$0xff]
    %v46 = vld [vmem:[%s1 + $0x18] sm:$0xff]
    %v47 = vld [vmem:[%s1 + $0x20] sm:$0xff]
    %v48 = vld [vmem:[%s1 + $0x28] sm:$0xff]
    %v49 = vld [vmem:[%s1 + $0x30] sm:$0xff]
    %v50 = vld [vmem:[%s1 + $0x38] sm:$0xff]
    %v51 = vld [vmem:[%s1 + $0x40] sm:$0xff]
    %v52 = vld [vmem:[%s1 + $0x48] sm:$0xff]
    %v53 = vld [vmem:[%s1 + $0x50] sm:$0xff]
    %v54 = vld [vmem:[%s1 + $0x58] sm:$0xff]
    %v55 = vld [vmem:[%s1 + $0x60] sm:$0xff]
    %v56 = vld [vmem:[%s1 + $0x68] sm:$0xff]
    %v57 = vld [vmem:[%s1 + $0x70] sm:$0xff]
    %v58 = vld [vmem:[%s1 + $0x78] sm:$0xff]
    %v59 = vld [vmem:[%s1 + $0x80] sm:$0xff]
    %v60 = vld [vmem:[%s1 + $0x88] sm:$0xff]
    %v61 = vld [vmem:[%s1 + $0x90] sm:$0xff]
    %v62 = vld [vmem:[%s1 + $0x98] sm:$0xff]
    %v63 = vld [vmem:[%s1 + $0xa0] sm:$0xff]
    %v64 = vld [vmem:[%s1 + $0xa8] sm:$0xff]
    %v65 = vld [vmem:[%s1 + $0xb0] sm:$0xff]
    %v66 = vld [vmem:[%s1 + $0xb8] sm:$0xff]
    %v67 = vld [vmem:[%s1 + $0xc0] sm:$0xff]
    %v68 = vld [vmem:[%s1 + $0xc8] sm:$0xff]
    %v69 = vld [vmem:[%s1 + $0xd0] sm:$0xff]
    %v70 = vld [vmem:[%s1 + $0xd8] sm:$0xff]
    %v71 = vld [vmem:[%s1 + $0xe0] sm:$0xff]
    %v72 = vld [vmem:[%s1 + $0xe8] sm:$0xff]
    %v73 = vld [vmem:[%s1 + $0xf0] sm:$0xff]
    %v74 = vld [vmem:[%s1 + $0xf8] sm:$0xff]
    %v75 = vld [vmem:[%s2] sm:$0x3]
    %v77 = vlaneseq
    %v78 = vshrl.u32 %v77, 7
    %v79 = vsub.s32 0, %v78
    %v80 = vrot.slane %v75, %v79
    %v81 = vlaneseq
    %v82 = vshrl.u32 %v81, 7
    %v83 = vsub.s32 1, %v82
    %v84 = vrot.slane %v75, %v83
    %87 = vmatprep.subr.mxu0 %v74
    %88 = vmatpush1.msra.mxu0 %v73
    %89 = vmatprep.subr.mxu0 %v72
    %90 = vmatpush1.msra.mxu0 %v71
    %91 = vmatprep.subr.mxu0 %v70
    %92 = vmatpush1.msra.mxu0 %v69
    %93 = vmatprep.subr.mxu0 %v68
    %94 = vmatpush1.msra.mxu0 %v67
    %95 = vmatprep.subr.mxu0 %v66
    %96 = vmatpush1.msra.mxu0 %v65
    %97 = vmatprep.subr.mxu0 %v64
    %98 = vmatpush1.msra.mxu0 %v63
    %99 = vmatprep.subr.mxu0 %v62
    %100 = vmatpush1.msra.mxu0 %v61
    %101 = vmatprep.subr.mxu0 %v60
    %102 = vmatpush1.msra.mxu0 %v59
    %103 = vmatprep.subr.mxu0 %v58
    %104 = vmatpush1.msra.mxu0 %v57
    %105 = vmatprep.subr.mxu0 %v56
    %106 = vmatpush1.msra.mxu0 %v55
    %107 = vmatprep.subr.mxu0 %v54
    %108 = vmatpush1.msra.mxu0 %v53
    %109 = vmatprep.subr.mxu0 %v52
    %110 = vmatpush1.msra.mxu0 %v51
    %111 = vmatprep.subr.mxu0 %v50
    %112 = vmatpush1.msra.mxu0 %v49
    %113 = vmatprep.subr.mxu0 %v48
    %114 = vmatpush1.msra.mxu0 %v47
    %115 = vmatprep.subr.mxu0 %v46
    %116 = vmatpush1.msra.mxu0 %v45
    %117 = vmatprep.subr.mxu0 %v44
    %118 = vmatpush1.msra.mxu0 %v43
    %119 = vmatprep.subr.mxu0 0.0
    %120 = vmatpush2.msra.mxu0 0.0
    %121 = vmatprep.subr.mxu0 0.0
    %122 = vmatpush2.msra.mxu0 0.0
    %123 = vmatprep.subr.mxu0 0.0
    %124 = vmatpush2.msra.mxu0 0.0
    %125 = vmatprep.subr.mxu0 0.0
    %126 = vmatpush2.msra.mxu0 0.0
    %127 = vmatprep.subr.mxu0 0.0
    %128 = vmatpush2.msra.mxu0 0.0
    %129 = vmatprep.subr.mxu0 0.0
    %130 = vmatpush2.msra.mxu0 0.0
    %131 = vmatprep.subr.mxu0 0.0
    %132 = vmatpush2.msra.mxu0 0.0
    %133 = vmatprep.subr.mxu0 0.0
    %134 = vmatpush2.msra.mxu0 0.0
    %135 = vmatprep.subr.mxu0 0.0
    %136 = vmatpush2.msra.mxu0 0.0
    %137 = vmatprep.subr.mxu0 0.0
    %138 = vmatpush2.msra.mxu0 0.0
    %139 = vmatprep.subr.mxu0 0.0
    %140 = vmatpush2.msra.mxu0 0.0
    %141 = vmatprep.subr.mxu0 0.0
    %142 = vmatpush2.msra.mxu0 0.0
    %143 = vmatprep.subr.mxu0 0.0
    %144 = vmatpush2.msra.mxu0 0.0
    %145 = vmatprep.subr.mxu0 0.0
    %146 = vmatpush2.msra.mxu0 0.0
    %147 = vmatprep.subr.mxu0 0.0
    %148 = vmatpush2.msra.mxu0 0.0
    %149 = vmatprep.subr.mxu0 0.0
    %150 = vmatpush2.msra.mxu0 0.0
    %151 = vmatprep.mubr.f32.mxu0 0.0
    %152 = vmatmul.mubr.f32.gmra.mxu0 %v33
    %v153 = vpop.f32.mrf.mxu0
    %v154 = vadd.f32 %v80, %v153
    %v155 = vpop.f32.mrf.mxu0
    %v156 = vadd.f32 %v84, %v155
    %157 = vmatprep.mubr.f32.mxu0 0.0
    %158 = vmatmul.mubr.f32.gmra.mxu0 %v34
    %v159 = vpop.f32.mrf.mxu0
    %v160 = vadd.f32 %v80, %v159
    %v161 = vpop.f32.mrf.mxu0
    %v162 = vadd.f32 %v84, %v161
    %163 = vmatprep.mubr.f32.mxu0 0.0
    %164 = vmatmul.mubr.f32.gmra.mxu0 %v35
    %v165 = vpop.f32.mrf.mxu0
    %v166 = vadd.f32 %v80, %v165
    %v167 = vpop.f32.mrf.mxu0
    %v168 = vadd.f32 %v84, %v167
    %169 = vmatprep.mubr.f32.mxu0 0.0
    %170 = vmatmul.mubr.f32.gmra.mxu0 %v36
    %v171 = vpop.f32.mrf.mxu0
    %v172 = vadd.f32 %v80, %v171
    %v173 = vpop.f32.mrf.mxu0
    %v174 = vadd.f32 %v84, %v173
    %175 = vmatprep.mubr.f32.mxu0 0.0
    %176 = vmatmul.mubr.f32.gmra.mxu0 %v37
    %v177 = vpop.f32.mrf.mxu0
    %v178 = vadd.f32 %v80, %v177
    %v179 = vpop.f32.mrf.mxu0
    %v180 = vadd.f32 %v84, %v179
    %181 = vmatprep.mubr.f32.mxu0 0.0
    %182 = vmatmul.mubr.f32.gmra.mxu0 %v38
    %v183 = vpop.f32.mrf.mxu0
    %v184 = vadd.f32 %v80, %v183
    %v185 = vpop.f32.mrf.mxu0
    %v186 = vadd.f32 %v84, %v185
    %187 = vmatprep.mubr.f32.mxu0 0.0
    %188 = vmatmul.mubr.f32.gmra.mxu0 %v39
    %v189 = vpop.f32.mrf.mxu0
    %v190 = vadd.f32 %v80, %v189
    %v191 = vpop.f32.mrf.mxu0
    %v192 = vadd.f32 %v84, %v191
    %193 = vmatprep.mubr.f32.mxu0 0.0
    %194 = vmatmul.mubr.f32.gmra.mxu0 %v40
    %v195 = vpop.f32.mrf.mxu0
    %v196 = vadd.f32 %v80, %v195
    %v197 = vpop.f32.mrf.mxu0
    %v198 = vadd.f32 %v84, %v197
    %199 = vmatprep.mubr.f32.mxu0 0.0
    %200 = vmatmul.mubr.f32.gmra.mxu0 %v41
    %v201 = vpop.f32.mrf.mxu0
    %v202 = vadd.f32 %v80, %v201
    %v203 = vpop.f32.mrf.mxu0
    %v204 = vadd.f32 %v84, %v203
    %205 = vmatprep.mubr.f32.mxu0 0.0
    %206 = vmatmul.mubr.f32.gmra.mxu0 %v42
    %v207 = vpop.f32.mrf.mxu0
    %v208 = vadd.f32 %v80, %v207
    %v209 = vpop.f32.mrf.mxu0
    %v210 = vadd.f32 %v84, %v209
    %211 = vdwg.mxu0
    %v212 = vmax.f32 %v154, 0.0
    %v213 = vmax.f32 %v156, 0.0
    %v214 = vmax.f32 %v160, 0.0
    %v215 = vmax.f32 %v162, 0.0
    %v216 = vmax.f32 %v166, 0.0
    %v217 = vmax.f32 %v168, 0.0
    %v218 = vmax.f32 %v172, 0.0
    %v219 = vmax.f32 %v174, 0.0
    %v220 = vmax.f32 %v178, 0.0
    %v221 = vmax.f32 %v180, 0.0
    %v222 = vmax.f32 %v184, 0.0
    %v223 = vmax.f32 %v186, 0.0
    %v224 = vmax.f32 %v190, 0.0
    %v225 = vmax.f32 %v192, 0.0
    %v226 = vmax.f32 %v196, 0.0
    %v227 = vmax.f32 %v198, 0.0
    %v228 = vmax.f32 %v202, 0.0
    %v229 = vmax.f32 %v204, 0.0
    %v230 = vmax.f32 %v208, 0.0
    %v231 = vmax.f32 %v210, 0.0
    %232 = vst [vmem:[#allocation2] sm:$0xff] %v212
    %233 = vst [vmem:[#allocation2 + $0x8] sm:$0xff] %v213
    %234 = vst [vmem:[#allocation2 + $0x10] sm:$0xff] %v214
    %235 = vst [vmem:[#allocation2 + $0x18] sm:$0xff] %v215
    %236 = vst [vmem:[#allocation2 + $0x20] sm:$0xff] %v216
    %237 = vst [vmem:[#allocation2 + $0x28] sm:$0xff] %v217
    %238 = vst [vmem:[#allocation2 + $0x30] sm:$0xff] %v218
    %239 = vst [vmem:[#allocation2 + $0x38] sm:$0xff] %v219
    %240 = vst [vmem:[#allocation2 + $0x40] sm:$0xff] %v220
    %241 = vst [vmem:[#allocation2 + $0x48] sm:$0xff] %v221
    %242 = vst [vmem:[#allocation2 + $0x50] sm:$0xff] %v222
    %243 = vst [vmem:[#allocation2 + $0x58] sm:$0xff] %v223
    %244 = vst [vmem:[#allocation2 + $0x60] sm:$0xff] %v224
    %245 = vst [vmem:[#allocation2 + $0x68] sm:$0xff] %v225
    %246 = vst [vmem:[#allocation2 + $0x70] sm:$0xff] %v226
    %247 = vst [vmem:[#allocation2 + $0x78] sm:$0xff] %v227
    %248 = vst [vmem:[#allocation2 + $0x80] sm:$0xff] %v228
    %249 = vst [vmem:[#allocation2 + $0x88] sm:$0xff] %v229
    %250 = vst [vmem:[#allocation2 + $0x90] sm:$0xff] %v230
    %251 = vst [vmem:[#allocation2 + $0x98] sm:$0xff] %v231
    %v252 = vld [vmem:[#allocation2] sm:$0xff]
    %v253 = vld [vmem:[#allocation2 + $0x8] sm:$0xff]
    %v254 = vld [vmem:[#allocation2 + $0x10] sm:$0xff]
    %v255 = vld [vmem:[#allocation2 + $0x18] sm:$0xff]
    %v256 = vld [vmem:[#allocation2 + $0x20] sm:$0xff]
    %v257 = vld [vmem:[#allocation2 + $0x28] sm:$0xff]
    %v258 = vld [vmem:[#allocation2 + $0x30] sm:$0xff]
    %v259 = vld [vmem:[#allocation2 + $0x38] sm:$0xff]
    %v260 = vld [vmem:[#allocation2 + $0x40] sm:$0xff]
    %v261 = vld [vmem:[#allocation2 + $0x48] sm:$0xff]
    %v262 = vld [vmem:[#allocation2 + $0x50] sm:$0xff]
    %v263 = vld [vmem:[#allocation2 + $0x58] sm:$0xff]
    %v264 = vld [vmem:[#allocation2 + $0x60] sm:$0xff]
    %v265 = vld [vmem:[#allocation2 + $0x68] sm:$0xff]
    %v266 = vld [vmem:[#allocation2 + $0x70] sm:$0xff]
    %v267 = vld [vmem:[#allocation2 + $0x78] sm:$0xff]
    %v268 = vld [vmem:[#allocation2 + $0x80] sm:$0xff]
    %v269 = vld [vmem:[#allocation2 + $0x88] sm:$0xff]
    %v270 = vld [vmem:[#allocation2 + $0x90] sm:$0xff]
    %v271 = vld [vmem:[#allocation2 + $0x98] sm:$0xff]
    %v272 = vld [vmem:[%s3] sm:$0xff]
    %v273 = vld [vmem:[%s3 + $0x8] sm:$0xff]
    %v274 = vld [vmem:[%s3 + $0x10] sm:$0xff]
    %v275 = vld [vmem:[%s3 + $0x18] sm:$0xff]
    %v276 = vld [vmem:[%s3 + $0x20] sm:$0xff]
    %v277 = vld [vmem:[%s3 + $0x28] sm:$0xff]
    %v278 = vld [vmem:[%s3 + $0x30] sm:$0xff]
    %v279 = vld [vmem:[%s3 + $0x38] sm:$0xff]
    %v280 = vld [vmem:[%s3 + $0x40] sm:$0xff]
    %v281 = vld [vmem:[%s3 + $0x48] sm:$0xff]
    %v282 = vld [vmem:[%s3 + $0x50] sm:$0xff]
    %v283 = vld [vmem:[%s3 + $0x58] sm:$0xff]
    %v284 = vld [vmem:[%s3 + $0x60] sm:$0xff]
    %v285 = vld [vmem:[%s3 + $0x68] sm:$0xff]
    %v286 = vld [vmem:[%s3 + $0x70] sm:$0xff]
    %v287 = vld [vmem:[%s3 + $0x78] sm:$0xff]
    %v288 = vld [vmem:[%s3 + $0x80] sm:$0xff]
    %v289 = vld [vmem:[%s3 + $0x88] sm:$0xff]
    %v290 = vld [vmem:[%s3 + $0x90] sm:$0xff]
    %v291 = vld [vmem:[%s3 + $0x98] sm:$0xff]
    %v292 = vld [vmem:[%s3 + $0xa0] sm:$0xff]
    %v293 = vld [vmem:[%s3 + $0xa8] sm:$0xff]
    %v294 = vld [vmem:[%s3 + $0xb0] sm:$0xff]
    %v295 = vld [vmem:[%s3 + $0xb8] sm:$0xff]
    %v296 = vld [vmem:[%s3 + $0xc0] sm:$0xff]
    %v297 = vld [vmem:[%s3 + $0xc8] sm:$0xff]
    %v298 = vld [vmem:[%s3 + $0xd0] sm:$0xff]
    %v299 = vld [vmem:[%s3 + $0xd8] sm:$0xff]
    %v300 = vld [vmem:[%s3 + $0xe0] sm:$0xff]
    %v301 = vld [vmem:[%s3 + $0xe8] sm:$0xff]
    %v302 = vld [vmem:[%s3 + $0xf0] sm:$0xff]
    %v303 = vld [vmem:[%s3 + $0xf8] sm:$0xff]
    %v304 = vld [vmem:[%s4] sm:$0x1]
    %v306 = vlaneseq
    %v307 = vshrl.u32 %v306, 7
    %v308 = vsub.s32 0, %v307
    %v309 = vrot.slane %v304, %v308
    %311 = vmatprep.subr.mxu0 0.0
    %312 = vmatpush1.msra.mxu0 %v287
    %313 = vmatprep.subr.mxu0 0.0
    %314 = vmatpush1.msra.mxu0 %v286
    %315 = vmatprep.subr.mxu0 0.0
    %316 = vmatpush1.msra.mxu0 %v285
    %317 = vmatprep.subr.mxu0 0.0
    %318 = vmatpush1.msra.mxu0 %v284
    %319 = vmatprep.subr.mxu0 0.0
    %320 = vmatpush1.msra.mxu0 %v283
    %321 = vmatprep.subr.mxu0 0.0
    %322 = vmatpush1.msra.mxu0 %v282
    %323 = vmatprep.subr.mxu0 0.0
    %324 = vmatpush1.msra.mxu0 %v281
    %325 = vmatprep.subr.mxu0 0.0
    %326 = vmatpush1.msra.mxu0 %v280
    %327 = vmatprep.subr.mxu0 0.0
    %328 = vmatpush1.msra.mxu0 %v279
    %329 = vmatprep.subr.mxu0 0.0
    %330 = vmatpush1.msra.mxu0 %v278
    %331 = vmatprep.subr.mxu0 0.0
    %332 = vmatpush1.msra.mxu0 %v277
    %333 = vmatprep.subr.mxu0 0.0
    %334 = vmatpush1.msra.mxu0 %v276
    %335 = vmatprep.subr.mxu0 0.0
    %336 = vmatpush1.msra.mxu0 %v275
    %337 = vmatprep.subr.mxu0 0.0
    %338 = vmatpush1.msra.mxu0 %v274
    %339 = vmatprep.subr.mxu0 0.0
    %340 = vmatpush1.msra.mxu0 %v273
    %341 = vmatprep.subr.mxu0 0.0
    %342 = vmatpush1.msra.mxu0 %v272
    %343 = vmatprep.subr.mxu0 0.0
    %344 = vmatpush2.msra.mxu0 %v303
    %345 = vmatprep.subr.mxu0 0.0
    %346 = vmatpush2.msra.mxu0 %v302
    %347 = vmatprep.subr.mxu0 0.0
    %348 = vmatpush2.msra.mxu0 %v301
    %349 = vmatprep.subr.mxu0 0.0
    %350 = vmatpush2.msra.mxu0 %v300
    %351 = vmatprep.subr.mxu0 0.0
    %352 = vmatpush2.msra.mxu0 %v299
    %353 = vmatprep.subr.mxu0 0.0
    %354 = vmatpush2.msra.mxu0 %v298
    %355 = vmatprep.subr.mxu0 0.0
    %356 = vmatpush2.msra.mxu0 %v297
    %357 = vmatprep.subr.mxu0 0.0
    %358 = vmatpush2.msra.mxu0 %v296
    %359 = vmatprep.subr.mxu0 0.0
    %360 = vmatpush2.msra.mxu0 %v295
    %361 = vmatprep.subr.mxu0 0.0
    %362 = vmatpush2.msra.mxu0 %v294
    %363 = vmatprep.subr.mxu0 0.0
    %364 = vmatpush2.msra.mxu0 %v293
    %365 = vmatprep.subr.mxu0 0.0
    %366 = vmatpush2.msra.mxu0 %v292
    %367 = vmatprep.subr.mxu0 0.0
    %368 = vmatpush2.msra.mxu0 %v291
    %369 = vmatprep.subr.mxu0 0.0
    %370 = vmatpush2.msra.mxu0 %v290
    %371 = vmatprep.subr.mxu0 0.0
    %372 = vmatpush2.msra.mxu0 %v289
    %373 = vmatprep.subr.mxu0 0.0
    %374 = vmatpush2.msra.mxu0 %v288
    %375 = vmatprep.mubr.f32.mxu0 %v253
    %376 = vmatmul.mubr.f32.gmra.mxu0 %v252
    %v377 = vpop.f32.mrf.mxu0
    %v378 = vadd.f32 %v309, %v377
    %v379 = vpop.f32.mrf.mxu0
    %380 = vmatprep.mubr.f32.mxu0 %v255
    %381 = vmatmul.mubr.f32.gmra.mxu0 %v254
    %v382 = vpop.f32.mrf.mxu0
    %v383 = vadd.f32 %v309, %v382
    %v384 = vpop.f32.mrf.mxu0
    %385 = vmatprep.mubr.f32.mxu0 %v257
    %386 = vmatmul.mubr.f32.gmra.mxu0 %v256
    %v387 = vpop.f32.mrf.mxu0
    %v388 = vadd.f32 %v309, %v387
    %v389 = vpop.f32.mrf.mxu0
    %390 = vmatprep.mubr.f32.mxu0 %v259
    %391 = vmatmul.mubr.f32.gmra.mxu0 %v258
    %v392 = vpop.f32.mrf.mxu0
    %v393 = vadd.f32 %v309, %v392
    %v394 = vpop.f32.mrf.mxu0
    %395 = vmatprep.mubr.f32.mxu0 %v261
    %396 = vmatmul.mubr.f32.gmra.mxu0 %v260
    %v397 = vpop.f32.mrf.mxu0
    %v398 = vadd.f32 %v309, %v397
    %v399 = vpop.f32.mrf.mxu0
    %400 = vmatprep.mubr.f32.mxu0 %v263
    %401 = vmatmul.mubr.f32.gmra.mxu0 %v262
    %v402 = vpop.f32.mrf.mxu0
    %v403 = vadd.f32 %v309, %v402
    %v404 = vpop.f32.mrf.mxu0
    %405 = vmatprep.mubr.f32.mxu0 %v265
    %406 = vmatmul.mubr.f32.gmra.mxu0 %v264
    %v407 = vpop.f32.mrf.mxu0
    %v408 = vadd.f32 %v309, %v407
    %v409 = vpop.f32.mrf.mxu0
    %410 = vmatprep.mubr.f32.mxu0 %v267
    %411 = vmatmul.mubr.f32.gmra.mxu0 %v266
    %v412 = vpop.f32.mrf.mxu0
    %v413 = vadd.f32 %v309, %v412
    %v414 = vpop.f32.mrf.mxu0
    %415 = vmatprep.mubr.f32.mxu0 %v269
    %416 = vmatmul.mubr.f32.gmra.mxu0 %v268
    %v417 = vpop.f32.mrf.mxu0
    %v418 = vadd.f32 %v309, %v417
    %v419 = vpop.f32.mrf.mxu0
    %420 = vmatprep.mubr.f32.mxu0 %v271
    %421 = vmatmul.mubr.f32.gmra.mxu0 %v270
    %v422 = vpop.f32.mrf.mxu0
    %v423 = vadd.f32 %v309, %v422
    %v424 = vpop.f32.mrf.mxu0
    %425 = vdwg.mxu0
    %v426 = vmax.f32 %v378, 0.0
    %v427 = vmax.f32 %v383, 0.0
    %v428 = vmax.f32 %v388, 0.0
    %v429 = vmax.f32 %v393, 0.0
    %v430 = vmax.f32 %v398, 0.0
    %v431 = vmax.f32 %v403, 0.0
    %v432 = vmax.f32 %v408, 0.0
    %v433 = vmax.f32 %v413, 0.0
    %v434 = vmax.f32 %v418, 0.0
    %v435 = vmax.f32 %v423, 0.0
    %vm436 = vcmask 261120
    %437 = vst.msk [vmem:[#allocation3] sm:$0xff] %vm436, %v426
    %438 = vst.msk [vmem:[#allocation3 + $0x8] sm:$0xff] %vm436, %v427
    %439 = vst.msk [vmem:[#allocation3 + $0x10] sm:$0xff] %vm436, %v428
    %440 = vst.msk [vmem:[#allocation3 + $0x18] sm:$0xff] %vm436, %v429
    %441 = vst.msk [vmem:[#allocation3 + $0x20] sm:$0xff] %vm436, %v430
    %442 = vst.msk [vmem:[#allocation3 + $0x28] sm:$0xff] %vm436, %v431
    %443 = vst.msk [vmem:[#allocation3 + $0x30] sm:$0xff] %vm436, %v432
    %444 = vst.msk [vmem:[#allocation3 + $0x38] sm:$0xff] %vm436, %v433
    %445 = vst.msk [vmem:[#allocation3 + $0x40] sm:$0xff] %vm436, %v434
    %446 = vst.msk [vmem:[#allocation3 + $0x48] sm:$0xff] %vm436, %v435
    %447 = vst.msk [vmem:[#allocation3 + $0x50] sm:$0xff] %vm436, 0.0
    %v448 = vld [vmem:[#allocation3] sm:$0xff]
    %v449 = vld [vmem:[#allocation3 + $0x8] sm:$0xff]
    %v450 = vld [vmem:[#allocation3 + $0x10] sm:$0xff]
    %v451 = vld [vmem:[#allocation3 + $0x18] sm:$0xff]
    %v452 = vld [vmem:[#allocation3 + $0x20] sm:$0xff]
    %v453 = vld [vmem:[#allocation3 + $0x28] sm:$0xff]
    %v454 = vld [vmem:[#allocation3 + $0x30] sm:$0xff]
    %v455 = vld [vmem:[#allocation3 + $0x38] sm:$0xff]
    %v456 = vld [vmem:[#allocation3 + $0x40] sm:$0xff]
    %v457 = vld [vmem:[#allocation3 + $0x48] sm:$0xff]
    %v458 = vld [vmem:[%s5] sm:$0xff]
    %v459 = vld [vmem:[%s5 + $0x8] sm:$0xff]
    %v460 = vld [vmem:[%s5 + $0x10] sm:$0xff]
    %v461 = vld [vmem:[%s5 + $0x18] sm:$0xff]
    %v463 = vsel %vm436, %v448, 0
    %v466 = vsel %vm436, %v449, 0
    %v469 = vsel %vm436, %v450, 0
    %v472 = vsel %vm436, %v451, 0
    %v475 = vsel %vm436, %v452, 0
    %v478 = vsel %vm436, %v453, 0
    %v481 = vsel %vm436, %v454, 0
    %v484 = vsel %vm436, %v455, 0
    %v487 = vsel %vm436, %v456, 0
    %v490 = vsel %vm436, %v457, 0
    %492 = vmatprep.subr.mxu0 0.0
    %493 = vmatpush1.msra.mxu0 0.0
    %494 = vmatprep.subr.mxu0 0.0
    %495 = vmatpush1.msra.mxu0 0.0
    %496 = vmatprep.subr.mxu0 0.0
    %497 = vmatpush1.msra.mxu0 0.0
    %498 = vmatprep.subr.mxu0 0.0
    %499 = vmatpush1.msra.mxu0 0.0
    %500 = vmatprep.subr.mxu0 0.0
    %501 = vmatpush1.msra.mxu0 0.0
    %502 = vmatprep.subr.mxu0 0.0
    %503 = vmatpush1.msra.mxu0 0.0
    %504 = vmatprep.subr.mxu0 0.0
    %505 = vmatpush1.msra.mxu0 0.0
    %506 = vmatprep.subr.mxu0 0.0
    %507 = vmatpush1.msra.mxu0 0.0
    %508 = vmatprep.subr.mxu0 0.0
    %509 = vmatpush1.msra.mxu0 0.0
    %510 = vmatprep.subr.mxu0 0.0
    %511 = vmatpush1.msra.mxu0 0.0
    %512 = vmatprep.subr.mxu0 0.0
    %513 = vmatpush1.msra.mxu0 0.0
    %514 = vmatprep.subr.mxu0 0.0
    %515 = vmatpush1.msra.mxu0 0.0
    %516 = vmatprep.subr.mxu0 0.0
    %517 = vmatpush1.msra.mxu0 %v461
    %518 = vmatprep.subr.mxu0 0.0
    %519 = vmatpush1.msra.mxu0 %v460
    %520 = vmatprep.subr.mxu0 0.0
    %521 = vmatpush1.msra.mxu0 %v459
    %522 = vmatprep.subr.mxu0 0.0
    %523 = vmatpush1.msra.mxu0 %v458
    %524 = vmatprep.subr.mxu0 0.0
    %525 = vmatpush2.msra.mxu0 0.0
    %526 = vmatprep.subr.mxu0 0.0
    %527 = vmatpush2.msra.mxu0 0.0
    %528 = vmatprep.subr.mxu0 0.0
    %529 = vmatpush2.msra.mxu0 0.0
    %530 = vmatprep.subr.mxu0 0.0
    %531 = vmatpush2.msra.mxu0 0.0
    %532 = vmatprep.subr.mxu0 0.0
    %533 = vmatpush2.msra.mxu0 0.0
    %534 = vmatprep.subr.mxu0 0.0
    %535 = vmatpush2.msra.mxu0 0.0
    %536 = vmatprep.subr.mxu0 0.0
    %537 = vmatpush2.msra.mxu0 0.0
    %538 = vmatprep.subr.mxu0 0.0
    %539 = vmatpush2.msra.mxu0 0.0
    %540 = vmatprep.subr.mxu0 0.0
    %541 = vmatpush2.msra.mxu0 0.0
    %542 = vmatprep.subr.mxu0 0.0
    %543 = vmatpush2.msra.mxu0 0.0
    %544 = vmatprep.subr.mxu0 0.0
    %545 = vmatpush2.msra.mxu0 0.0
    %546 = vmatprep.subr.mxu0 0.0
    %547 = vmatpush2.msra.mxu0 0.0
    %548 = vmatprep.subr.mxu0 0.0
    %549 = vmatpush2.msra.mxu0 0.0
    %550 = vmatprep.subr.mxu0 0.0
    %551 = vmatpush2.msra.mxu0 0.0
    %552 = vmatprep.subr.mxu0 0.0
    %553 = vmatpush2.msra.mxu0 0.0
    %554 = vmatprep.subr.mxu0 0.0
    %555 = vmatpush2.msra.mxu0 0.0
    %556 = vmatprep.mubr.f32.mxu0 0.0
    %557 = vmatmul.mubr.f32.gmra.mxu0 %v463
    %v558 = vpop.f32.mrf.mxu0
    %v559 = vadd.f32 0.0, %v558
    %v560 = vpop.f32.mrf.mxu0
    %561 = vmatprep.mubr.f32.mxu0 0.0
    %562 = vmatmul.mubr.f32.gmra.mxu0 %v466
    %v563 = vpop.f32.mrf.mxu0
    %v564 = vadd.f32 0.0, %v563
    %v565 = vpop.f32.mrf.mxu0
    %566 = vmatprep.mubr.f32.mxu0 0.0
    %567 = vmatmul.mubr.f32.gmra.mxu0 %v469
    %v568 = vpop.f32.mrf.mxu0
    %v569 = vadd.f32 0.0, %v568
    %v570 = vpop.f32.mrf.mxu0
    %571 = vmatprep.mubr.f32.mxu0 0.0
    %572 = vmatmul.mubr.f32.gmra.mxu0 %v472
    %v573 = vpop.f32.mrf.mxu0
    %v574 = vadd.f32 0.0, %v573
    %v575 = vpop.f32.mrf.mxu0
    %576 = vmatprep.mubr.f32.mxu0 0.0
    %577 = vmatmul.mubr.f32.gmra.mxu0 %v475
    %v578 = vpop.f32.mrf.mxu0
    %v579 = vadd.f32 0.0, %v578
    %v580 = vpop.f32.mrf.mxu0
    %581 = vmatprep.mubr.f32.mxu0 0.0
    %582 = vmatmul.mubr.f32.gmra.mxu0 %v478
    %v583 = vpop.f32.mrf.mxu0
    %v584 = vadd.f32 0.0, %v583
    %v585 = vpop.f32.mrf.mxu0
    %586 = vmatprep.mubr.f32.mxu0 0.0
    %587 = vmatmul.mubr.f32.gmra.mxu0 %v481
    %v588 = vpop.f32.mrf.mxu0
    %v589 = vadd.f32 0.0, %v588
    %v590 = vpop.f32.mrf.mxu0
    %591 = vmatprep.mubr.f32.mxu0 0.0
    %592 = vmatmul.mubr.f32.gmra.mxu0 %v484
    %v593 = vpop.f32.mrf.mxu0
    %v594 = vadd.f32 0.0, %v593
    %v595 = vpop.f32.mrf.mxu0
    %596 = vmatprep.mubr.f32.mxu0 0.0
    %597 = vmatmul.mubr.f32.gmra.mxu0 %v487
    %v598 = vpop.f32.mrf.mxu0
    %v599 = vadd.f32 0.0, %v598
    %v600 = vpop.f32.mrf.mxu0
    %601 = vmatprep.mubr.f32.mxu0 0.0
    %602 = vmatmul.mubr.f32.gmra.mxu0 %v490
    %v603 = vpop.f32.mrf.mxu0
    %v604 = vadd.f32 0.0, %v603
    %v605 = vpop.f32.mrf.mxu0
    %606 = vdwg.mxu0
    %vm607 = vcmask 130048
    %608 = vst.msk [vmem:[#allocation4] sm:$0xff] %vm607, %v559
    %609 = vst.msk [vmem:[#allocation4 + $0x8] sm:$0xff] %vm607, %v564
    %610 = vst.msk [vmem:[#allocation4 + $0x10] sm:$0xff] %vm607, %v569
    %611 = vst.msk [vmem:[#allocation4 + $0x18] sm:$0xff] %vm607, %v574
    %612 = vst.msk [vmem:[#allocation4 + $0x20] sm:$0xff] %vm607, %v579
    %613 = vst.msk [vmem:[#allocation4 + $0x28] sm:$0xff] %vm607, %v584
    %614 = vst.msk [vmem:[#allocation4 + $0x30] sm:$0xff] %vm607, %v589
    %615 = vst.msk [vmem:[#allocation4 + $0x38] sm:$0xff] %vm607, %v594
    %616 = vst.msk [vmem:[#allocation4 + $0x40] sm:$0xff] %vm607, %v599
    %617 = vst.msk [vmem:[#allocation4 + $0x48] sm:$0xff] %vm607, %v604
    %v618 = vld [vmem:[#allocation3 + $0x1] sm:$0xff]
    %v619 = vld [vmem:[#allocation3 + $0x9] sm:$0xff]
    %v620 = vld [vmem:[#allocation3 + $0x11] sm:$0xff]
    %v621 = vld [vmem:[#allocation3 + $0x19] sm:$0xff]
    %v622 = vld [vmem:[#allocation3 + $0x21] sm:$0xff]
    %v623 = vld [vmem:[#allocation3 + $0x29] sm:$0xff]
    %v624 = vld [vmem:[#allocation3 + $0x31] sm:$0xff]
    %v625 = vld [vmem:[#allocation3 + $0x39] sm:$0xff]
    %v626 = vld [vmem:[#allocation3 + $0x41] sm:$0xff]
    %v627 = vld [vmem:[#allocation3 + $0x49] sm:$0xff]
    %s628 = scalar_lea.vmem %s5, 32
    %v629 = vld [vmem:[%s628] sm:$0xff]
    %v630 = vld [vmem:[%s628 + $0x8] sm:$0xff]
    %v631 = vld [vmem:[%s628 + $0x10] sm:$0xff]
    %v632 = vld [vmem:[%s628 + $0x18] sm:$0xff]
    %v634 = vsel %vm436, %v618, 0
    %v637 = vsel %vm436, %v619, 0
    %v640 = vsel %vm436, %v620, 0
    %v643 = vsel %vm436, %v621, 0
    %v646 = vsel %vm436, %v622, 0
    %v649 = vsel %vm436, %v623, 0
    %v652 = vsel %vm436, %v624, 0
    %v655 = vsel %vm436, %v625, 0
    %v658 = vsel %vm436, %v626, 0
    %v661 = vsel %vm436, %v627, 0
    %663 = vmatprep.subr.mxu0 0.0
    %664 = vmatpush1.msra.mxu0 0.0
    %665 = vmatprep.subr.mxu0 0.0
    %666 = vmatpush1.msra.mxu0 0.0
    %667 = vmatprep.subr.mxu0 0.0
    %668 = vmatpush1.msra.mxu0 0.0
    %669 = vmatprep.subr.mxu0 0.0
    %670 = vmatpush1.msra.mxu0 0.0
    %671 = vmatprep.subr.mxu0 0.0
    %672 = vmatpush1.msra.mxu0 0.0
    %673 = vmatprep.subr.mxu0 0.0
    %674 = vmatpush1.msra.mxu0 0.0
    %675 = vmatprep.subr.mxu0 0.0
    %676 = vmatpush1.msra.mxu0 0.0
    %677 = vmatprep.subr.mxu0 0.0
    %678 = vmatpush1.msra.mxu0 0.0
    %679 = vmatprep.subr.mxu0 0.0
    %680 = vmatpush1.msra.mxu0 0.0
    %681 = vmatprep.subr.mxu0 0.0
    %682 = vmatpush1.msra.mxu0 0.0
    %683 = vmatprep.subr.mxu0 0.0
    %684 = vmatpush1.msra.mxu0 0.0
    %685 = vmatprep.subr.mxu0 0.0
    %686 = vmatpush1.msra.mxu0 0.0
    %687 = vmatprep.subr.mxu0 0.0
    %688 = vmatpush1.msra.mxu0 %v632
    %689 = vmatprep.subr.mxu0 0.0
    %690 = vmatpush1.msra.mxu0 %v631
    %691 = vmatprep.subr.mxu0 0.0
    %692 = vmatpush1.msra.mxu0 %v630
    %693 = vmatprep.subr.mxu0 0.0
    %694 = vmatpush1.msra.mxu0 %v629
    %695 = vmatprep.subr.mxu0 0.0
    %696 = vmatpush2.msra.mxu0 0.0
    %697 = vmatprep.subr.mxu0 0.0
    %698 = vmatpush2.msra.mxu0 0.0
    %699 = vmatprep.subr.mxu0 0.0
    %700 = vmatpush2.msra.mxu0 0.0
    %701 = vmatprep.subr.mxu0 0.0
    %702 = vmatpush2.msra.mxu0 0.0
    %703 = vmatprep.subr.mxu0 0.0
    %704 = vmatpush2.msra.mxu0 0.0
    %705 = vmatprep.subr.mxu0 0.0
    %706 = vmatpush2.msra.mxu0 0.0
    %707 = vmatprep.subr.mxu0 0.0
    %708 = vmatpush2.msra.mxu0 0.0
    %709 = vmatprep.subr.mxu0 0.0
    %710 = vmatpush2.msra.mxu0 0.0
    %711 = vmatprep.subr.mxu0 0.0
    %712 = vmatpush2.msra.mxu0 0.0
    %713 = vmatprep.subr.mxu0 0.0
    %714 = vmatpush2.msra.mxu0 0.0
    %715 = vmatprep.subr.mxu0 0.0
    %716 = vmatpush2.msra.mxu0 0.0
    %717 = vmatprep.subr.mxu0 0.0
    %718 = vmatpush2.msra.mxu0 0.0
    %719 = vmatprep.subr.mxu0 0.0
    %720 = vmatpush2.msra.mxu0 0.0
    %721 = vmatprep.subr.mxu0 0.0
    %722 = vmatpush2.msra.mxu0 0.0
    %723 = vmatprep.subr.mxu0 0.0
    %724 = vmatpush2.msra.mxu0 0.0
    %725 = vmatprep.subr.mxu0 0.0
    %726 = vmatpush2.msra.mxu0 0.0
    %727 = vmatprep.mubr.f32.mxu0 0.0
    %728 = vmatmul.mubr.f32.gmra.mxu0 %v634
    %v729 = vpop.f32.mrf.mxu0
    %v730 = vadd.f32 0.0, %v729
    %v731 = vpop.f32.mrf.mxu0
    %732 = vmatprep.mubr.f32.mxu0 0.0
    %733 = vmatmul.mubr.f32.gmra.mxu0 %v637
    %v734 = vpop.f32.mrf.mxu0
    %v735 = vadd.f32 0.0, %v734
    %v736 = vpop.f32.mrf.mxu0
    %737 = vmatprep.mubr.f32.mxu0 0.0
    %738 = vmatmul.mubr.f32.gmra.mxu0 %v640
    %v739 = vpop.f32.mrf.mxu0
    %v740 = vadd.f32 0.0, %v739
    %v741 = vpop.f32.mrf.mxu0
    %742 = vmatprep.mubr.f32.mxu0 0.0
    %743 = vmatmul.mubr.f32.gmra.mxu0 %v643
    %v744 = vpop.f32.mrf.mxu0
    %v745 = vadd.f32 0.0, %v744
    %v746 = vpop.f32.mrf.mxu0
    %747 = vmatprep.mubr.f32.mxu0 0.0
    %748 = vmatmul.mubr.f32.gmra.mxu0 %v646
    %v749 = vpop.f32.mrf.mxu0
    %v750 = vadd.f32 0.0, %v749
    %v751 = vpop.f32.mrf.mxu0
    %752 = vmatprep.mubr.f32.mxu0 0.0
    %753 = vmatmul.mubr.f32.gmra.mxu0 %v649
    %v754 = vpop.f32.mrf.mxu0
    %v755 = vadd.f32 0.0, %v754
    %v756 = vpop.f32.mrf.mxu0
    %757 = vmatprep.mubr.f32.mxu0 0.0
    %758 = vmatmul.mubr.f32.gmra.mxu0 %v652
    %v759 = vpop.f32.mrf.mxu0
    %v760 = vadd.f32 0.0, %v759
    %v761 = vpop.f32.mrf.mxu0
    %762 = vmatprep.mubr.f32.mxu0 0.0
    %763 = vmatmul.mubr.f32.gmra.mxu0 %v655
    %v764 = vpop.f32.mrf.mxu0
    %v765 = vadd.f32 0.0, %v764
    %v766 = vpop.f32.mrf.mxu0
    %767 = vmatprep.mubr.f32.mxu0 0.0
    %768 = vmatmul.mubr.f32.gmra.mxu0 %v658
    %v769 = vpop.f32.mrf.mxu0
    %v770 = vadd.f32 0.0, %v769
    %v771 = vpop.f32.mrf.mxu0
    %772 = vmatprep.mubr.f32.mxu0 0.0
    %773 = vmatmul.mubr.f32.gmra.mxu0 %v661
    %v774 = vpop.f32.mrf.mxu0
    %v775 = vadd.f32 0.0, %v774
    %v776 = vpop.f32.mrf.mxu0
    %777 = vdwg.mxu0
    %v778 = vld [vmem:[#allocation4] sm:$0xff]
    %v779 = vld [vmem:[#allocation4 + $0x8] sm:$0xff]
    %v780 = vld [vmem:[#allocation4 + $0x10] sm:$0xff]
    %v781 = vld [vmem:[#allocation4 + $0x18] sm:$0xff]
    %v782 = vld [vmem:[#allocation4 + $0x20] sm:$0xff]
    %v783 = vld [vmem:[#allocation4 + $0x28] sm:$0xff]
    %v784 = vld [vmem:[#allocation4 + $0x30] sm:$0xff]
    %v785 = vld [vmem:[#allocation4 + $0x38] sm:$0xff]
    %v786 = vld [vmem:[#allocation4 + $0x40] sm:$0xff]
    %v787 = vld [vmem:[#allocation4 + $0x48] sm:$0xff]
    %v788 = vadd.f32 %v778, %v730
    %v789 = vadd.f32 %v779, %v735
    %v790 = vadd.f32 %v780, %v740
    %v791 = vadd.f32 %v781, %v745
    %v792 = vadd.f32 %v782, %v750
    %v793 = vadd.f32 %v783, %v755
    %v794 = vadd.f32 %v784, %v760
    %v795 = vadd.f32 %v785, %v765
    %v796 = vadd.f32 %v786, %v770
    %v797 = vadd.f32 %v787, %v775
    %798 = vst.msk [vmem:[#allocation4] sm:$0xff] %vm607, %v788
    %799 = vst.msk [vmem:[#allocation4 + $0x8] sm:$0xff] %vm607, %v789
    %800 = vst.msk [vmem:[#allocation4 + $0x10] sm:$0xff] %vm607, %v790
    %801 = vst.msk [vmem:[#allocation4 + $0x18] sm:$0xff] %vm607, %v791
    %802 = vst.msk [vmem:[#allocation4 + $0x20] sm:$0xff] %vm607, %v792
    %803 = vst.msk [vmem:[#allocation4 + $0x28] sm:$0xff] %vm607, %v793
    %804 = vst.msk [vmem:[#allocation4 + $0x30] sm:$0xff] %vm607, %v794
    %805 = vst.msk [vmem:[#allocation4 + $0x38] sm:$0xff] %vm607, %v795
    %806 = vst.msk [vmem:[#allocation4 + $0x40] sm:$0xff] %vm607, %v796
    %807 = vst.msk [vmem:[#allocation4 + $0x48] sm:$0xff] %vm607, %v797
    %v808 = vld [vmem:[#allocation3 + $0x6] sm:$0xff]
    %v809 = vld [vmem:[#allocation3 + $0xe] sm:$0xff]
    %v810 = vld [vmem:[#allocation3 + $0x16] sm:$0xff]
    %v811 = vld [vmem:[#allocation3 + $0x1e] sm:$0xff]
    %v812 = vld [vmem:[#allocation3 + $0x26] sm:$0xff]
    %v813 = vld [vmem:[#allocation3 + $0x2e] sm:$0xff]
    %v814 = vld [vmem:[#allocation3 + $0x36] sm:$0xff]
    %v815 = vld [vmem:[#allocation3 + $0x3e] sm:$0xff]
    %v816 = vld [vmem:[#allocation3 + $0x46] sm:$0xff]
    %v817 = vld [vmem:[#allocation3 + $0x4e] sm:$0xff]
    %s818 = scalar_lea.vmem %s5, 64
    %v819 = vld [vmem:[%s818] sm:$0xff]
    %v820 = vld [vmem:[%s818 + $0x8] sm:$0xff]
    %v821 = vld [vmem:[%s818 + $0x10] sm:$0xff]
    %v822 = vld [vmem:[%s818 + $0x18] sm:$0xff]
    %v824 = vsel %vm436, %v808, 0
    %v827 = vsel %vm436, %v809, 0
    %v830 = vsel %vm436, %v810, 0
    %v833 = vsel %vm436, %v811, 0
    %v836 = vsel %vm436, %v812, 0
    %v839 = vsel %vm436, %v813, 0
    %v842 = vsel %vm436, %v814, 0
    %v845 = vsel %vm436, %v815, 0
    %v848 = vsel %vm436, %v816, 0
    %v851 = vsel %vm436, %v817, 0
    %853 = vmatprep.subr.mxu0 0.0
    %854 = vmatpush1.msra.mxu0 0.0
    %855 = vmatprep.subr.mxu0 0.0
    %856 = vmatpush1.msra.mxu0 0.0
    %857 = vmatprep.subr.mxu0 0.0
    %858 = vmatpush1.msra.mxu0 0.0
    %859 = vmatprep.subr.mxu0 0.0
    %860 = vmatpush1.msra.mxu0 0.0
    %861 = vmatprep.subr.mxu0 0.0
    %862 = vmatpush1.msra.mxu0 0.0
    %863 = vmatprep.subr.mxu0 0.0
    %864 = vmatpush1.msra.mxu0 0.0
    %865 = vmatprep.subr.mxu0 0.0
    %866 = vmatpush1.msra.mxu0 0.0
    %867 = vmatprep.subr.mxu0 0.0
    %868 = vmatpush1.msra.mxu0 0.0
    %869 = vmatprep.subr.mxu0 0.0
    %870 = vmatpush1.msra.mxu0 0.0
    %871 = vmatprep.subr.mxu0 0.0
    %872 = vmatpush1.msra.mxu0 0.0
    %873 = vmatprep.subr.mxu0 0.0
    %874 = vmatpush1.msra.mxu0 0.0
    %875 = vmatprep.subr.mxu0 0.0
    %876 = vmatpush1.msra.mxu0 0.0
    %877 = vmatprep.subr.mxu0 0.0
    %878 = vmatpush1.msra.mxu0 %v822
    %879 = vmatprep.subr.mxu0 0.0
    %880 = vmatpush1.msra.mxu0 %v821
    %881 = vmatprep.subr.mxu0 0.0
    %882 = vmatpush1.msra.mxu0 %v820
    %883 = vmatprep.subr.mxu0 0.0
    %884 = vmatpush1.msra.mxu0 %v819
    %885 = vmatprep.subr.mxu0 0.0
    %886 = vmatpush2.msra.mxu0 0.0
    %887 = vmatprep.subr.mxu0 0.0
    %888 = vmatpush2.msra.mxu0 0.0
    %889 = vmatprep.subr.mxu0 0.0
    %890 = vmatpush2.msra.mxu0 0.0
    %891 = vmatprep.subr.mxu0 0.0
    %892 = vmatpush2.msra.mxu0 0.0
    %893 = vmatprep.subr.mxu0 0.0
    %894 = vmatpush2.msra.mxu0 0.0
    %895 = vmatprep.subr.mxu0 0.0
    %896 = vmatpush2.msra.mxu0 0.0
    %897 = vmatprep.subr.mxu0 0.0
    %898 = vmatpush2.msra.mxu0 0.0
    %899 = vmatprep.subr.mxu0 0.0
    %900 = vmatpush2.msra.mxu0 0.0
    %901 = vmatprep.subr.mxu0 0.0
    %902 = vmatpush2.msra.mxu0 0.0
    %903 = vmatprep.subr.mxu0 0.0
    %904 = vmatpush2.msra.mxu0 0.0
    %905 = vmatprep.subr.mxu0 0.0
    %906 = vmatpush2.msra.mxu0 0.0
    %907 = vmatprep.subr.mxu0 0.0
    %908 = vmatpush2.msra.mxu0 0.0
    %909 = vmatprep.subr.mxu0 0.0
    %910 = vmatpush2.msra.mxu0 0.0
    %911 = vmatprep.subr.mxu0 0.0
    %912 = vmatpush2.msra.mxu0 0.0
    %913 = vmatprep.subr.mxu0 0.0
    %914 = vmatpush2.msra.mxu0 0.0
    %915 = vmatprep.subr.mxu0 0.0
    %916 = vmatpush2.msra.mxu0 0.0
    %917 = vmatprep.mubr.f32.mxu0 0.0
    %918 = vmatmul.mubr.f32.gmra.mxu0 %v824
    %v919 = vpop.f32.mrf.mxu0
    %v920 = vadd.f32 0.0, %v919
    %v921 = vpop.f32.mrf.mxu0
    %922 = vmatprep.mubr.f32.mxu0 0.0
    %923 = vmatmul.mubr.f32.gmra.mxu0 %v827
    %v924 = vpop.f32.mrf.mxu0
    %v925 = vadd.f32 0.0, %v924
    %v926 = vpop.f32.mrf.mxu0
    %927 = vmatprep.mubr.f32.mxu0 0.0
    %928 = vmatmul.mubr.f32.gmra.mxu0 %v830
    %v929 = vpop.f32.mrf.mxu0
    %v930 = vadd.f32 0.0, %v929
    %v931 = vpop.f32.mrf.mxu0
    %932 = vmatprep.mubr.f32.mxu0 0.0
    %933 = vmatmul.mubr.f32.gmra.mxu0 %v833
    %v934 = vpop.f32.mrf.mxu0
    %v935 = vadd.f32 0.0, %v934
    %v936 = vpop.f32.mrf.mxu0
    %937 = vmatprep.mubr.f32.mxu0 0.0
    %938 = vmatmul.mubr.f32.gmra.mxu0 %v836
    %v939 = vpop.f32.mrf.mxu0
    %v940 = vadd.f32 0.0, %v939
    %v941 = vpop.f32.mrf.mxu0
    %942 = vmatprep.mubr.f32.mxu0 0.0
    %943 = vmatmul.mubr.f32.gmra.mxu0 %v839
    %v944 = vpop.f32.mrf.mxu0
    %v945 = vadd.f32 0.0, %v944
    %v946 = vpop.f32.mrf.mxu0
    %947 = vmatprep.mubr.f32.mxu0 0.0
    %948 = vmatmul.mubr.f32.gmra.mxu0 %v842
    %v949 = vpop.f32.mrf.mxu0
    %v950 = vadd.f32 0.0, %v949
    %v951 = vpop.f32.mrf.mxu0
    %952 = vmatprep.mubr.f32.mxu0 0.0
    %953 = vmatmul.mubr.f32.gmra.mxu0 %v845
    %v954 = vpop.f32.mrf.mxu0
    %v955 = vadd.f32 0.0, %v954
    %v956 = vpop.f32.mrf.mxu0
    %957 = vmatprep.mubr.f32.mxu0 0.0
    %958 = vmatmul.mubr.f32.gmra.mxu0 %v848
    %v959 = vpop.f32.mrf.mxu0
    %v960 = vadd.f32 0.0, %v959
    %v961 = vpop.f32.mrf.mxu0
    %962 = vmatprep.mubr.f32.mxu0 0.0
    %963 = vmatmul.mubr.f32.gmra.mxu0 %v851
    %v964 = vpop.f32.mrf.mxu0
    %v965 = vadd.f32 0.0, %v964
    %v966 = vpop.f32.mrf.mxu0
    %967 = vdwg.mxu0
    %v968 = vld [vmem:[#allocation4] sm:$0xff]
    %v969 = vld [vmem:[#allocation4 + $0x8] sm:$0xff]
    %v970 = vld [vmem:[#allocation4 + $0x10] sm:$0xff]
    %v971 = vld [vmem:[#allocation4 + $0x18] sm:$0xff]
    %v972 = vld [vmem:[#allocation4 + $0x20] sm:$0xff]
    %v973 = vld [vmem:[#allocation4 + $0x28] sm:$0xff]
    %v974 = vld [vmem:[#allocation4 + $0x30] sm:$0xff]
    %v975 = vld [vmem:[#allocation4 + $0x38] sm:$0xff]
    %v976 = vld [vmem:[#allocation4 + $0x40] sm:$0xff]
    %v977 = vld [vmem:[#allocation4 + $0x48] sm:$0xff]
    %v978 = vadd.f32 %v968, %v920
    %v979 = vadd.f32 %v969, %v925
    %v980 = vadd.f32 %v970, %v930
    %v981 = vadd.f32 %v971, %v935
    %v982 = vadd.f32 %v972, %v940
    %v983 = vadd.f32 %v973, %v945
    %v984 = vadd.f32 %v974, %v950
    %v985 = vadd.f32 %v975, %v955
    %v986 = vadd.f32 %v976, %v960
    %v987 = vadd.f32 %v977, %v965
    %988 = vst.msk [vmem:[#allocation4] sm:$0xff] %vm607, %v978
    %989 = vst.msk [vmem:[#allocation4 + $0x8] sm:$0xff] %vm607, %v979
    %990 = vst.msk [vmem:[#allocation4 + $0x10] sm:$0xff] %vm607, %v980
    %991 = vst.msk [vmem:[#allocation4 + $0x18] sm:$0xff] %vm607, %v981
    %992 = vst.msk [vmem:[#allocation4 + $0x20] sm:$0xff] %vm607, %v982
    %993 = vst.msk [vmem:[#allocation4 + $0x28] sm:$0xff] %vm607, %v983
    %994 = vst.msk [vmem:[#allocation4 + $0x30] sm:$0xff] %vm607, %v984
    %995 = vst.msk [vmem:[#allocation4 + $0x38] sm:$0xff] %vm607, %v985
    %996 = vst.msk [vmem:[#allocation4 + $0x40] sm:$0xff] %vm607, %v986
    %997 = vst.msk [vmem:[#allocation4 + $0x48] sm:$0xff] %vm607, %v987
    %v998 = vld [vmem:[#allocation3 + $0x7] sm:$0xff]
    %v999 = vld [vmem:[#allocation3 + $0xf] sm:$0xff]
    %v1000 = vld [vmem:[#allocation3 + $0x17] sm:$0xff]
    %v1001 = vld [vmem:[#allocation3 + $0x1f] sm:$0xff]
    %v1002 = vld [vmem:[#allocation3 + $0x27] sm:$0xff]
    %v1003 = vld [vmem:[#allocation3 + $0x2f] sm:$0xff]
    %v1004 = vld [vmem:[#allocation3 + $0x37] sm:$0xff]
    %v1005 = vld [vmem:[#allocation3 + $0x3f] sm:$0xff]
    %v1006 = vld [vmem:[#allocation3 + $0x47] sm:$0xff]
    %v1007 = vld [vmem:[#allocation3 + $0x4f] sm:$0xff]
    %s1008 = scalar_lea.vmem %s5, 96
    %v1009 = vld [vmem:[%s1008] sm:$0xff]
    %v1010 = vld [vmem:[%s1008 + $0x8] sm:$0xff]
    %v1011 = vld [vmem:[%s1008 + $0x10] sm:$0xff]
    %v1012 = vld [vmem:[%s1008 + $0x18] sm:$0xff]
    %v1014 = vsel %vm436, %v998, 0
    %v1017 = vsel %vm436, %v999, 0
    %v1020 = vsel %vm436, %v1000, 0
    %v1023 = vsel %vm436, %v1001, 0
    %v1026 = vsel %vm436, %v1002, 0
    %v1029 = vsel %vm436, %v1003, 0
    %v1032 = vsel %vm436, %v1004, 0
    %v1035 = vsel %vm436, %v1005, 0
    %v1038 = vsel %vm436, %v1006, 0
    %v1041 = vsel %vm436, %v1007, 0
    %1043 = vmatprep.subr.mxu0 0.0
    %1044 = vmatpush1.msra.mxu0 0.0
    %1045 = vmatprep.subr.mxu0 0.0
    %1046 = vmatpush1.msra.mxu0 0.0
    %1047 = vmatprep.subr.mxu0 0.0
    %1048 = vmatpush1.msra.mxu0 0.0
    %1049 = vmatprep.subr.mxu0 0.0
    %1050 = vmatpush1.msra.mxu0 0.0
    %1051 = vmatprep.subr.mxu0 0.0
    %1052 = vmatpush1.msra.mxu0 0.0
    %1053 = vmatprep.subr.mxu0 0.0
    %1054 = vmatpush1.msra.mxu0 0.0
    %1055 = vmatprep.subr.mxu0 0.0
    %1056 = vmatpush1.msra.mxu0 0.0
    %1057 = vmatprep.subr.mxu0 0.0
    %1058 = vmatpush1.msra.mxu0 0.0
    %1059 = vmatprep.subr.mxu0 0.0
    %1060 = vmatpush1.msra.mxu0 0.0
    %1061 = vmatprep.subr.mxu0 0.0
    %1062 = vmatpush1.msra.mxu0 0.0
    %1063 = vmatprep.subr.mxu0 0.0
    %1064 = vmatpush1.msra.mxu0 0.0
    %1065 = vmatprep.subr.mxu0 0.0
    %1066 = vmatpush1.msra.mxu0 0.0
    %1067 = vmatprep.subr.mxu0 0.0
    %1068 = vmatpush1.msra.mxu0 %v1012
    %1069 = vmatprep.subr.mxu0 0.0
    %1070 = vmatpush1.msra.mxu0 %v1011
    %1071 = vmatprep.subr.mxu0 0.0
    %1072 = vmatpush1.msra.mxu0 %v1010
    %1073 = vmatprep.subr.mxu0 0.0
    %1074 = vmatpush1.msra.mxu0 %v1009
    %1075 = vmatprep.subr.mxu0 0.0
    %1076 = vmatpush2.msra.mxu0 0.0
    %1077 = vmatprep.subr.mxu0 0.0
    %1078 = vmatpush2.msra.mxu0 0.0
    %1079 = vmatprep.subr.mxu0 0.0
    %1080 = vmatpush2.msra.mxu0 0.0
    %1081 = vmatprep.subr.mxu0 0.0
    %1082 = vmatpush2.msra.mxu0 0.0
    %1083 = vmatprep.subr.mxu0 0.0
    %1084 = vmatpush2.msra.mxu0 0.0
    %1085 = vmatprep.subr.mxu0 0.0
    %1086 = vmatpush2.msra.mxu0 0.0
    %1087 = vmatprep.subr.mxu0 0.0
    %1088 = vmatpush2.msra.mxu0 0.0
    %1089 = vmatprep.subr.mxu0 0.0
    %1090 = vmatpush2.msra.mxu0 0.0
    %1091 = vmatprep.subr.mxu0 0.0
    %1092 = vmatpush2.msra.mxu0 0.0
    %1093 = vmatprep.subr.mxu0 0.0
    %1094 = vmatpush2.msra.mxu0 0.0
    %1095 = vmatprep.subr.mxu0 0.0
    %1096 = vmatpush2.msra.mxu0 0.0
    %1097 = vmatprep.subr.mxu0 0.0
    %1098 = vmatpush2.msra.mxu0 0.0
    %1099 = vmatprep.subr.mxu0 0.0
    %1100 = vmatpush2.msra.mxu0 0.0
    %1101 = vmatprep.subr.mxu0 0.0
    %1102 = vmatpush2.msra.mxu0 0.0
    %1103 = vmatprep.subr.mxu0 0.0
    %1104 = vmatpush2.msra.mxu0 0.0
    %1105 = vmatprep.subr.mxu0 0.0
    %1106 = vmatpush2.msra.mxu0 0.0
    %1107 = vmatprep.mubr.f32.mxu0 0.0
    %1108 = vmatmul.mubr.f32.gmra.mxu0 %v1014
    %v1109 = vpop.f32.mrf.mxu0
    %v1110 = vadd.f32 0.0, %v1109
    %v1111 = vpop.f32.mrf.mxu0
    %1112 = vmatprep.mubr.f32.mxu0 0.0
    %1113 = vmatmul.mubr.f32.gmra.mxu0 %v1017
    %v1114 = vpop.f32.mrf.mxu0
    %v1115 = vadd.f32 0.0, %v1114
    %v1116 = vpop.f32.mrf.mxu0
    %1117 = vmatprep.mubr.f32.mxu0 0.0
    %1118 = vmatmul.mubr.f32.gmra.mxu0 %v1020
    %v1119 = vpop.f32.mrf.mxu0
    %v1120 = vadd.f32 0.0, %v1119
    %v1121 = vpop.f32.mrf.mxu0
    %1122 = vmatprep.mubr.f32.mxu0 0.0
    %1123 = vmatmul.mubr.f32.gmra.mxu0 %v1023
    %v1124 = vpop.f32.mrf.mxu0
    %v1125 = vadd.f32 0.0, %v1124
    %v1126 = vpop.f32.mrf.mxu0
    %1127 = vmatprep.mubr.f32.mxu0 0.0
    %1128 = vmatmul.mubr.f32.gmra.mxu0 %v1026
    %v1129 = vpop.f32.mrf.mxu0
    %v1130 = vadd.f32 0.0, %v1129
    %v1131 = vpop.f32.mrf.mxu0
    %1132 = vmatprep.mubr.f32.mxu0 0.0
    %1133 = vmatmul.mubr.f32.gmra.mxu0 %v1029
    %v1134 = vpop.f32.mrf.mxu0
    %v1135 = vadd.f32 0.0, %v1134
    %v1136 = vpop.f32.mrf.mxu0
    %1137 = vmatprep.mubr.f32.mxu0 0.0
    %1138 = vmatmul.mubr.f32.gmra.mxu0 %v1032
    %v1139 = vpop.f32.mrf.mxu0
    %v1140 = vadd.f32 0.0, %v1139
    %v1141 = vpop.f32.mrf.mxu0
    %1142 = vmatprep.mubr.f32.mxu0 0.0
    %1143 = vmatmul.mubr.f32.gmra.mxu0 %v1035
    %v1144 = vpop.f32.mrf.mxu0
    %v1145 = vadd.f32 0.0, %v1144
    %v1146 = vpop.f32.mrf.mxu0
    %1147 = vmatprep.mubr.f32.mxu0 0.0
    %1148 = vmatmul.mubr.f32.gmra.mxu0 %v1038
    %v1149 = vpop.f32.mrf.mxu0
    %v1150 = vadd.f32 0.0, %v1149
    %v1151 = vpop.f32.mrf.mxu0
    %1152 = vmatprep.mubr.f32.mxu0 0.0
    %1153 = vmatmul.mubr.f32.gmra.mxu0 %v1041
    %v1154 = vpop.f32.mrf.mxu0
    %v1155 = vadd.f32 0.0, %v1154
    %v1156 = vpop.f32.mrf.mxu0
    %1157 = vdwg.mxu0
    %v1158 = vld [vmem:[#allocation4] sm:$0xff]
    %v1159 = vld [vmem:[#allocation4 + $0x8] sm:$0xff]
    %v1160 = vld [vmem:[#allocation4 + $0x10] sm:$0xff]
    %v1161 = vld [vmem:[#allocation4 + $0x18] sm:$0xff]
    %v1162 = vld [vmem:[#allocation4 + $0x20] sm:$0xff]
    %v1163 = vld [vmem:[#allocation4 + $0x28] sm:$0xff]
    %v1164 = vld [vmem:[#allocation4 + $0x30] sm:$0xff]
    %v1165 = vld [vmem:[#allocation4 + $0x38] sm:$0xff]
    %v1166 = vld [vmem:[#allocation4 + $0x40] sm:$0xff]
    %v1167 = vld [vmem:[#allocation4 + $0x48] sm:$0xff]
    %v1168 = vadd.f32 %v1158, %v1110
    %v1169 = vadd.f32 %v1159, %v1115
    %v1170 = vadd.f32 %v1160, %v1120
    %v1171 = vadd.f32 %v1161, %v1125
    %v1172 = vadd.f32 %v1162, %v1130
    %v1173 = vadd.f32 %v1163, %v1135
    %v1174 = vadd.f32 %v1164, %v1140
    %v1175 = vadd.f32 %v1165, %v1145
    %v1176 = vadd.f32 %v1166, %v1150
    %v1177 = vadd.f32 %v1167, %v1155
    %1178 = vst.msk [vmem:[#allocation4] sm:$0xff] %vm607, %v1168
    %1179 = vst.msk [vmem:[#allocation4 + $0x8] sm:$0xff] %vm607, %v1169
    %1180 = vst.msk [vmem:[#allocation4 + $0x10] sm:$0xff] %vm607, %v1170
    %1181 = vst.msk [vmem:[#allocation4 + $0x18] sm:$0xff] %vm607, %v1171
    %1182 = vst.msk [vmem:[#allocation4 + $0x20] sm:$0xff] %vm607, %v1172
    %1183 = vst.msk [vmem:[#allocation4 + $0x28] sm:$0xff] %vm607, %v1173
    %1184 = vst.msk [vmem:[#allocation4 + $0x30] sm:$0xff] %vm607, %v1174
    %1185 = vst.msk [vmem:[#allocation4 + $0x38] sm:$0xff] %vm607, %v1175
    %1186 = vst.msk [vmem:[#allocation4 + $0x40] sm:$0xff] %vm607, %v1176
    %1187 = vst.msk [vmem:[#allocation4 + $0x48] sm:$0xff] %vm607, %v1177
    %v1188 = vld [vmem:[#allocation4] sm:$0xff]
    %v1189 = vld [vmem:[#allocation4 + $0x8] sm:$0xff]
    %v1190 = vld [vmem:[#allocation4 + $0x10] sm:$0xff]
    %v1191 = vld [vmem:[#allocation4 + $0x18] sm:$0xff]
    %v1192 = vld [vmem:[#allocation4 + $0x20] sm:$0xff]
    %v1193 = vld [vmem:[#allocation4 + $0x28] sm:$0xff]
    %v1194 = vld [vmem:[#allocation4 + $0x30] sm:$0xff]
    %v1195 = vld [vmem:[#allocation4 + $0x38] sm:$0xff]
    %v1196 = vld [vmem:[#allocation4 + $0x40] sm:$0xff]
    %v1197 = vld [vmem:[#allocation4 + $0x48] sm:$0xff]
    %v1198 = vld [vmem:[%s6] sm:$0x1]
    %v1200 = vlaneseq
    %v1201 = vshrl.u32 %v1200, 7
    %v1202 = vsub.s32 0, %v1201
    %v1203 = vrot.slane %v1198, %v1202
    %v1205 = vadd.f32 %v1188, %v1203
    %v1206 = vadd.f32 %v1189, %v1203
    %v1207 = vadd.f32 %v1190, %v1203
    %v1208 = vadd.f32 %v1191, %v1203
    %v1209 = vadd.f32 %v1192, %v1203
    %v1210 = vadd.f32 %v1193, %v1203
    %v1211 = vadd.f32 %v1194, %v1203
    %v1212 = vadd.f32 %v1195, %v1203
    %v1213 = vadd.f32 %v1196, %v1203
    %v1214 = vadd.f32 %v1197, %v1203
    %v1215 = vmax.f32 %v1205, 0.0
    %v1216 = vmax.f32 %v1206, 0.0
    %v1217 = vmax.f32 %v1207, 0.0
    %v1218 = vmax.f32 %v1208, 0.0
    %v1219 = vmax.f32 %v1209, 0.0
    %v1220 = vmax.f32 %v1210, 0.0
    %v1221 = vmax.f32 %v1211, 0.0
    %v1222 = vmax.f32 %v1212, 0.0
    %v1223 = vmax.f32 %v1213, 0.0
    %v1224 = vmax.f32 %v1214, 0.0
    %1225 = vst.msk [vmem:[#allocation4] sm:$0xff] %vm607, %v1215
    %1226 = vst.msk [vmem:[#allocation4 + $0x8] sm:$0xff] %vm607, %v1216
    %1227 = vst.msk [vmem:[#allocation4 + $0x10] sm:$0xff] %vm607, %v1217
    %1228 = vst.msk [vmem:[#allocation4 + $0x18] sm:$0xff] %vm607, %v1218
    %1229 = vst.msk [vmem:[#allocation4 + $0x20] sm:$0xff] %vm607, %v1219
    %1230 = vst.msk [vmem:[#allocation4 + $0x28] sm:$0xff] %vm607, %v1220
    %1231 = vst.msk [vmem:[#allocation4 + $0x30] sm:$0xff] %vm607, %v1221
    %1232 = vst.msk [vmem:[#allocation4 + $0x38] sm:$0xff] %vm607, %v1222
    %1233 = vst.msk [vmem:[#allocation4 + $0x40] sm:$0xff] %vm607, %v1223
    %1234 = vst.msk [vmem:[#allocation4 + $0x48] sm:$0xff] %vm607, %v1224
    %v1235 = vld [vmem:[#allocation4] sm:$0xff]
    %v1236 = vld [vmem:[#allocation4 + $0x8] sm:$0xff]
    %v1237 = vld [vmem:[#allocation4 + $0x10] sm:$0xff]
    %v1238 = vld [vmem:[#allocation4 + $0x18] sm:$0xff]
    %v1239 = vld [vmem:[#allocation4 + $0x20] sm:$0xff]
    %v1240 = vld [vmem:[#allocation4 + $0x28] sm:$0xff]
    %v1241 = vld [vmem:[#allocation4 + $0x30] sm:$0xff]
    %v1242 = vld [vmem:[#allocation4 + $0x38] sm:$0xff]
    %v1243 = vld [vmem:[#allocation4 + $0x40] sm:$0xff]
    %v1244 = vld [vmem:[#allocation4 + $0x48] sm:$0xff]
    %v1245 = vld [vmem:[%s7] sm:$0xff]
    %v1246 = vld [vmem:[%s7 + $0x8] sm:$0xff]
    %v1247 = vld [vmem:[%s7 + $0x10] sm:$0xff]
    %v1248 = vld [vmem:[%s7 + $0x18] sm:$0xff]
    %v1249 = vld [vmem:[%s7 + $0x20] sm:$0xff]
    %v1250 = vmul.f32 %v1235, %v1245
    %v1251 = vmul.f32 %v1236, %v1246
    %v1252 = vmul.f32 %v1237, %v1247
    %v1253 = vmul.f32 %v1238, %v1248
    %v1254 = vmul.f32 %v1239, %v1249
    %v1255 = vmul.f32 %v1240, %v1245
    %v1256 = vmul.f32 %v1241, %v1246
    %v1257 = vmul.f32 %v1242, %v1247
    %v1258 = vmul.f32 %v1243, %v1248
    %v1259 = vmul.f32 %v1244, %v1249
    %v1260 = vsel %vm607, %v1250, 0.0
    %1261 = vadd.xlane.f32.xlu0 %v1260
    %v1262 = vpop.xlane.xlu0 %1261
    %v1263 = vsel %vm607, %v1251, 0.0
    %1264 = vadd.xlane.f32.xlu0 %v1263
    %v1265 = vpop.xlane.xlu0 %1264
    %v1266 = vsel %vm607, %v1252, 0.0
    %1267 = vadd.xlane.f32.xlu0 %v1266
    %v1268 = vpop.xlane.xlu0 %1267
    %v1269 = vsel %vm607, %v1253, 0.0
    %1270 = vadd.xlane.f32.xlu0 %v1269
    %v1271 = vpop.xlane.xlu0 %1270
    %v1272 = vsel %vm607, %v1254, 0.0
    %1273 = vadd.xlane.f32.xlu0 %v1272
    %v1274 = vpop.xlane.xlu0 %1273
    %v1275 = vsel %vm607, %v1255, 0.0
    %1276 = vadd.xlane.f32.xlu0 %v1275
    %v1277 = vpop.xlane.xlu0 %1276
    %v1278 = vsel %vm607, %v1256, 0.0
    %1279 = vadd.xlane.f32.xlu0 %v1278
    %v1280 = vpop.xlane.xlu0 %1279
    %v1281 = vsel %vm607, %v1257, 0.0
    %1282 = vadd.xlane.f32.xlu0 %v1281
    %v1283 = vpop.xlane.xlu0 %1282
    %v1284 = vsel %vm607, %v1258, 0.0
    %1285 = vadd.xlane.f32.xlu0 %v1284
    %v1286 = vpop.xlane.xlu0 %1285
    %v1287 = vsel %vm607, %v1259, 0.0
    %1288 = vadd.xlane.f32.xlu0 %v1287
    %v1289 = vpop.xlane.xlu0 %1288
    %v1300 = vlaneseq
    %v1301 = vand.u32 %v1300, 127
    %v1302 = vlaneseq
    %v1303 = vshrl.u32 %v1302, 7
    %v1304 = vsub.s32 %v1301, %v1303
    %v1305 = vrot.slane %v1262, %v1304
    %v1306 = vadd.s32 %v1301, 4294967288
    %v1307 = vlaneseq
    %v1308 = vshrl.u32 %v1307, 7
    %v1309 = vsub.s32 %v1306, %v1308
    %v1310 = vrot.slane %v1265, %v1309
    %vm1311 = vcmask 130112
    %v1312 = vsel %vm1311, %v1310, %v1305
    %v1313 = vadd.s32 %v1301, 4294967280
    %v1314 = vlaneseq
    %v1315 = vshrl.u32 %v1314, 7
    %v1316 = vsub.s32 %v1313, %v1315
    %v1317 = vrot.slane %v1268, %v1316
    %vm1318 = vcmask 195712
    %v1319 = vsel %vm1318, %v1317, %v1312
    %v1320 = vadd.s32 %v1301, 4294967272
    %v1321 = vlaneseq
    %v1322 = vshrl.u32 %v1321, 7
    %v1323 = vsub.s32 %v1320, %v1322
    %v1324 = vrot.slane %v1271, %v1323
    %vm1325 = vcmask 261312
    %v1326 = vsel %vm1325, %v1324, %v1319
    %v1327 = vadd.s32 %v1301, 4294967264
    %v1328 = vlaneseq
    %v1329 = vshrl.u32 %v1328, 7
    %v1330 = vsub.s32 %v1327, %v1329
    %v1331 = vrot.slane %v1274, %v1330
    %vm1332 = vcmask 326912
    %v1333 = vsel %vm1332, %v1331, %v1326
    %v1334 = vlaneseq
    %v1335 = vshrl.u32 %v1334, 7
    %v1336 = vsub.s32 %v1301, %v1335
    %v1337 = vrot.slane %v1277, %v1336
    %v1338 = vlaneseq
    %v1339 = vshrl.u32 %v1338, 7
    %v1340 = vsub.s32 %v1306, %v1339
    %v1341 = vrot.slane %v1280, %v1340
    %v1342 = vsel %vm1311, %v1341, %v1337
    %v1343 = vlaneseq
    %v1344 = vshrl.u32 %v1343, 7
    %v1345 = vsub.s32 %v1313, %v1344
    %v1346 = vrot.slane %v1283, %v1345
    %v1347 = vsel %vm1318, %v1346, %v1342
    %v1348 = vlaneseq
    %v1349 = vshrl.u32 %v1348, 7
    %v1350 = vsub.s32 %v1320, %v1349
    %v1351 = vrot.slane %v1286, %v1350
    %v1352 = vsel %vm1325, %v1351, %v1347
    %v1353 = vlaneseq
    %v1354 = vshrl.u32 %v1353, 7
    %v1355 = vsub.s32 %v1327, %v1354
    %v1356 = vrot.slane %v1289, %v1355
    %v1357 = vsel %vm1332, %v1356, %v1352
    %vm1358 = vcmask 1041409
    %v1359 = vsel %vm1358, %v1357, %v1333
    %vm1361 = vcmask 320512
    %v1362 = vsel %vm1361, %v1359, 0.0
    %1363 = vadd.xlane.f32.xlu0 %v1362
    %v1364 = vpop.xlane.xlu0 %1363
    %s1365 = scalar_lea.vmem %s7, 40
    %v1366 = vld [vmem:[%s1365] sm:$0xff]
    %v1367 = vld [vmem:[%s1365 + $0x8] sm:$0xff]
    %v1368 = vld [vmem:[%s1365 + $0x10] sm:$0xff]
    %v1369 = vld [vmem:[%s1365 + $0x18] sm:$0xff]
    %v1370 = vld [vmem:[%s1365 + $0x20] sm:$0xff]
    %v1371 = vmul.f32 %v1235, %v1366
    %v1372 = vmul.f32 %v1236, %v1367
    %v1373 = vmul.f32 %v1237, %v1368
    %v1374 = vmul.f32 %v1238, %v1369
    %v1375 = vmul.f32 %v1239, %v1370
    %v1376 = vmul.f32 %v1240, %v1366
    %v1377 = vmul.f32 %v1241, %v1367
    %v1378 = vmul.f32 %v1242, %v1368
    %v1379 = vmul.f32 %v1243, %v1369
    %v1380 = vmul.f32 %v1244, %v1370
    %v1381 = vsel %vm607, %v1371, 0.0
    %1382 = vadd.xlane.f32.xlu0 %v1381
    %v1383 = vpop.xlane.xlu0 %1382
    %v1384 = vsel %vm607, %v1372, 0.0
    %1385 = vadd.xlane.f32.xlu0 %v1384
    %v1386 = vpop.xlane.xlu0 %1385
    %v1387 = vsel %vm607, %v1373, 0.0
    %1388 = vadd.xlane.f32.xlu0 %v1387
    %v1389 = vpop.xlane.xlu0 %1388
    %v1390 = vsel %vm607, %v1374, 0.0
    %1391 = vadd.xlane.f32.xlu0 %v1390
    %v1392 = vpop.xlane.xlu0 %1391
    %v1393 = vsel %vm607, %v1375, 0.0
    %1394 = vadd.xlane.f32.xlu0 %v1393
    %v1395 = vpop.xlane.xlu0 %1394
    %v1396 = vsel %vm607, %v1376, 0.0
    %1397 = vadd.xlane.f32.xlu0 %v1396
    %v1398 = vpop.xlane.xlu0 %1397
    %v1399 = vsel %vm607, %v1377, 0.0
    %1400 = vadd.xlane.f32.xlu0 %v1399
    %v1401 = vpop.xlane.xlu0 %1400
    %v1402 = vsel %vm607, %v1378, 0.0
    %1403 = vadd.xlane.f32.xlu0 %v1402
    %v1404 = vpop.xlane.xlu0 %1403
    %v1405 = vsel %vm607, %v1379, 0.0
    %1406 = vadd.xlane.f32.xlu0 %v1405
    %v1407 = vpop.xlane.xlu0 %1406
    %v1408 = vsel %vm607, %v1380, 0.0
    %1409 = vadd.xlane.f32.xlu0 %v1408
    %v1410 = vpop.xlane.xlu0 %1409
    %v1421 = vlaneseq
    %v1422 = vshrl.u32 %v1421, 7
    %v1423 = vsub.s32 %v1301, %v1422
    %v1424 = vrot.slane %v1383, %v1423
    %v1425 = vlaneseq
    %v1426 = vshrl.u32 %v1425, 7
    %v1427 = vsub.s32 %v1306, %v1426
    %v1428 = vrot.slane %v1386, %v1427
    %v1429 = vsel %vm1311, %v1428, %v1424
    %v1430 = vlaneseq
    %v1431 = vshrl.u32 %v1430, 7
    %v1432 = vsub.s32 %v1313, %v1431
    %v1433 = vrot.slane %v1389, %v1432
    %v1434 = vsel %vm1318, %v1433, %v1429
    %v1435 = vlaneseq
    %v1436 = vshrl.u32 %v1435, 7
    %v1437 = vsub.s32 %v1320, %v1436
    %v1438 = vrot.slane %v1392, %v1437
    %v1439 = vsel %vm1325, %v1438, %v1434
    %v1440 = vlaneseq
    %v1441 = vshrl.u32 %v1440, 7
    %v1442 = vsub.s32 %v1327, %v1441
    %v1443 = vrot.slane %v1395, %v1442
    %v1444 = vsel %vm1332, %v1443, %v1439
    %v1445 = vlaneseq
    %v1446 = vshrl.u32 %v1445, 7
    %v1447 = vsub.s32 %v1301, %v1446
    %v1448 = vrot.slane %v1398, %v1447
    %v1449 = vlaneseq
    %v1450 = vshrl.u32 %v1449, 7
    %v1451 = vsub.s32 %v1306, %v1450
    %v1452 = vrot.slane %v1401, %v1451
    %v1453 = vsel %vm1311, %v1452, %v1448
    %v1454 = vlaneseq
    %v1455 = vshrl.u32 %v1454, 7
    %v1456 = vsub.s32 %v1313, %v1455
    %v1457 = vrot.slane %v1404, %v1456
    %v1458 = vsel %vm1318, %v1457, %v1453
    %v1459 = vlaneseq
    %v1460 = vshrl.u32 %v1459, 7
    %v1461 = vsub.s32 %v1320, %v1460
    %v1462 = vrot.slane %v1407, %v1461
    %v1463 = vsel %vm1325, %v1462, %v1458
    %v1464 = vlaneseq
    %v1465 = vshrl.u32 %v1464, 7
    %v1466 = vsub.s32 %v1327, %v1465
    %v1467 = vrot.slane %v1410, %v1466
    %v1468 = vsel %vm1332, %v1467, %v1463
    %v1469 = vsel %vm1358, %v1468, %v1444
    %v1471 = vsel %vm1361, %v1469, 0.0
    %1472 = vadd.xlane.f32.xlu0 %v1471
    %v1473 = vpop.xlane.xlu0 %1472
    %s1474 = scalar_lea.vmem %s7, 80
    %v1475 = vld [vmem:[%s1474] sm:$0xff]
    %v1476 = vld [vmem:[%s1474 + $0x8] sm:$0xff]
    %v1477 = vld [vmem:[%s1474 + $0x10] sm:$0xff]
    %v1478 = vld [vmem:[%s1474 + $0x18] sm:$0xff]
    %v1479 = vld [vmem:[%s1474 + $0x20] sm:$0xff]
    %v1480 = vmul.f32 %v1235, %v1475
    %v1481 = vmul.f32 %v1236, %v1476
    %v1482 = vmul.f32 %v1237, %v1477
    %v1483 = vmul.f32 %v1238, %v1478
    %v1484 = vmul.f32 %v1239, %v1479
    %v1485 = vmul.f32 %v1240, %v1475
    %v1486 = vmul.f32 %v1241, %v1476
    %v1487 = vmul.f32 %v1242, %v1477
    %v1488 = vmul.f32 %v1243, %v1478
    %v1489 = vmul.f32 %v1244, %v1479
    %v1490 = vsel %vm607, %v1480, 0.0
    %1491 = vadd.xlane.f32.xlu0 %v1490
    %v1492 = vpop.xlane.xlu0 %1491
    %v1493 = vsel %vm607, %v1481, 0.0
    %1494 = vadd.xlane.f32.xlu0 %v1493
    %v1495 = vpop.xlane.xlu0 %1494
    %v1496 = vsel %vm607, %v1482, 0.0
    %1497 = vadd.xlane.f32.xlu0 %v1496
    %v1498 = vpop.xlane.xlu0 %1497
    %v1499 = vsel %vm607, %v1483, 0.0
    %1500 = vadd.xlane.f32.xlu0 %v1499
    %v1501 = vpop.xlane.xlu0 %1500
    %v1502 = vsel %vm607, %v1484, 0.0
    %1503 = vadd.xlane.f32.xlu0 %v1502
    %v1504 = vpop.xlane.xlu0 %1503
    %v1505 = vsel %vm607, %v1485, 0.0
    %1506 = vadd.xlane.f32.xlu0 %v1505
    %v1507 = vpop.xlane.xlu0 %1506
    %v1508 = vsel %vm607, %v1486, 0.0
    %1509 = vadd.xlane.f32.xlu0 %v1508
    %v1510 = vpop.xlane.xlu0 %1509
    %v1511 = vsel %vm607, %v1487, 0.0
    %1512 = vadd.xlane.f32.xlu0 %v1511
    %v1513 = vpop.xlane.xlu0 %1512
    %v1514 = vsel %vm607, %v1488, 0.0
    %1515 = vadd.xlane.f32.xlu0 %v1514
    %v1516 = vpop.xlane.xlu0 %1515
    %v1517 = vsel %vm607, %v1489, 0.0
    %1518 = vadd.xlane.f32.xlu0 %v1517
    %v1519 = vpop.xlane.xlu0 %1518
    %v1530 = vlaneseq
    %v1531 = vshrl.u32 %v1530, 7
    %v1532 = vsub.s32 %v1301, %v1531
    %v1533 = vrot.slane %v1492, %v1532
    %v1534 = vlaneseq
    %v1535 = vshrl.u32 %v1534, 7
    %v1536 = vsub.s32 %v1306, %v1535
    %v1537 = vrot.slane %v1495, %v1536
    %v1538 = vsel %vm1311, %v1537, %v1533
    %v1539 = vlaneseq
    %v1540 = vshrl.u32 %v1539, 7
    %v1541 = vsub.s32 %v1313, %v1540
    %v1542 = vrot.slane %v1498, %v1541
    %v1543 = vsel %vm1318, %v1542, %v1538
    %v1544 = vlaneseq
    %v1545 = vshrl.u32 %v1544, 7
    %v1546 = vsub.s32 %v1320, %v1545
    %v1547 = vrot.slane %v1501, %v1546
    %v1548 = vsel %vm1325, %v1547, %v1543
    %v1549 = vlaneseq
    %v1550 = vshrl.u32 %v1549, 7
    %v1551 = vsub.s32 %v1327, %v1550
    %v1552 = vrot.slane %v1504, %v1551
    %v1553 = vsel %vm1332, %v1552, %v1548
    %v1554 = vlaneseq
    %v1555 = vshrl.u32 %v1554, 7
    %v1556 = vsub.s32 %v1301, %v1555
    %v1557 = vrot.slane %v1507, %v1556
    %v1558 = vlaneseq
    %v1559 = vshrl.u32 %v1558, 7
    %v1560 = vsub.s32 %v1306, %v1559
    %v1561 = vrot.slane %v1510, %v1560
    %v1562 = vsel %vm1311, %v1561, %v1557
    %v1563 = vlaneseq
    %v1564 = vshrl.u32 %v1563, 7
    %v1565 = vsub.s32 %v1313, %v1564
    %v1566 = vrot.slane %v1513, %v1565
    %v1567 = vsel %vm1318, %v1566, %v1562
    %v1568 = vlaneseq
    %v1569 = vshrl.u32 %v1568, 7
    %v1570 = vsub.s32 %v1320, %v1569
    %v1571 = vrot.slane %v1516, %v1570
    %v1572 = vsel %vm1325, %v1571, %v1567
    %v1573 = vlaneseq
    %v1574 = vshrl.u32 %v1573, 7
    %v1575 = vsub.s32 %v1327, %v1574
    %v1576 = vrot.slane %v1519, %v1575
    %v1577 = vsel %vm1332, %v1576, %v1572
    %v1578 = vsel %vm1358, %v1577, %v1553
    %v1580 = vsel %vm1361, %v1578, 0.0
    %1581 = vadd.xlane.f32.xlu0 %v1580
    %v1582 = vpop.xlane.xlu0 %1581
    %s1583 = scalar_lea.vmem %s7, 120
    %v1584 = vld [vmem:[%s1583] sm:$0xff]
    %v1585 = vld [vmem:[%s1583 + $0x8] sm:$0xff]
    %v1586 = vld [vmem:[%s1583 + $0x10] sm:$0xff]
    %v1587 = vld [vmem:[%s1583 + $0x18] sm:$0xff]
    %v1588 = vld [vmem:[%s1583 + $0x20] sm:$0xff]
    %v1589 = vmul.f32 %v1235, %v1584
    %v1590 = vmul.f32 %v1236, %v1585
    %v1591 = vmul.f32 %v1237, %v1586
    %v1592 = vmul.f32 %v1238, %v1587
    %v1593 = vmul.f32 %v1239, %v1588
    %v1594 = vmul.f32 %v1240, %v1584
    %v1595 = vmul.f32 %v1241, %v1585
    %v1596 = vmul.f32 %v1242, %v1586
    %v1597 = vmul.f32 %v1243, %v1587
    %v1598 = vmul.f32 %v1244, %v1588
    %v1599 = vsel %vm607, %v1589, 0.0
    %1600 = vadd.xlane.f32.xlu0 %v1599
    %v1601 = vpop.xlane.xlu0 %1600
    %v1602 = vsel %vm607, %v1590, 0.0
    %1603 = vadd.xlane.f32.xlu0 %v1602
    %v1604 = vpop.xlane.xlu0 %1603
    %v1605 = vsel %vm607, %v1591, 0.0
    %1606 = vadd.xlane.f32.xlu0 %v1605
    %v1607 = vpop.xlane.xlu0 %1606
    %v1608 = vsel %vm607, %v1592, 0.0
    %1609 = vadd.xlane.f32.xlu0 %v1608
    %v1610 = vpop.xlane.xlu0 %1609
    %v1611 = vsel %vm607, %v1593, 0.0
    %1612 = vadd.xlane.f32.xlu0 %v1611
    %v1613 = vpop.xlane.xlu0 %1612
    %v1614 = vsel %vm607, %v1594, 0.0
    %1615 = vadd.xlane.f32.xlu0 %v1614
    %v1616 = vpop.xlane.xlu0 %1615
    %v1617 = vsel %vm607, %v1595, 0.0
    %1618 = vadd.xlane.f32.xlu0 %v1617
    %v1619 = vpop.xlane.xlu0 %1618
    %v1620 = vsel %vm607, %v1596, 0.0
    %1621 = vadd.xlane.f32.xlu0 %v1620
    %v1622 = vpop.xlane.xlu0 %1621
    %v1623 = vsel %vm607, %v1597, 0.0
    %1624 = vadd.xlane.f32.xlu0 %v1623
    %v1625 = vpop.xlane.xlu0 %1624
    %v1626 = vsel %vm607, %v1598, 0.0
    %1627 = vadd.xlane.f32.xlu0 %v1626
    %v1628 = vpop.xlane.xlu0 %1627
    %v1639 = vlaneseq
    %v1640 = vshrl.u32 %v1639, 7
    %v1641 = vsub.s32 %v1301, %v1640
    %v1642 = vrot.slane %v1601, %v1641
    %v1643 = vlaneseq
    %v1644 = vshrl.u32 %v1643, 7
    %v1645 = vsub.s32 %v1306, %v1644
    %v1646 = vrot.slane %v1604, %v1645
    %v1647 = vsel %vm1311, %v1646, %v1642
    %v1648 = vlaneseq
    %v1649 = vshrl.u32 %v1648, 7
    %v1650 = vsub.s32 %v1313, %v1649
    %v1651 = vrot.slane %v1607, %v1650
    %v1652 = vsel %vm1318, %v1651, %v1647
    %v1653 = vlaneseq
    %v1654 = vshrl.u32 %v1653, 7
    %v1655 = vsub.s32 %v1320, %v1654
    %v1656 = vrot.slane %v1610, %v1655
    %v1657 = vsel %vm1325, %v1656, %v1652
    %v1658 = vlaneseq
    %v1659 = vshrl.u32 %v1658, 7
    %v1660 = vsub.s32 %v1327, %v1659
    %v1661 = vrot.slane %v1613, %v1660
    %v1662 = vsel %vm1332, %v1661, %v1657
    %v1663 = vlaneseq
    %v1664 = vshrl.u32 %v1663, 7
    %v1665 = vsub.s32 %v1301, %v1664
    %v1666 = vrot.slane %v1616, %v1665
    %v1667 = vlaneseq
    %v1668 = vshrl.u32 %v1667, 7
    %v1669 = vsub.s32 %v1306, %v1668
    %v1670 = vrot.slane %v1619, %v1669
    %v1671 = vsel %vm1311, %v1670, %v1666
    %v1672 = vlaneseq
    %v1673 = vshrl.u32 %v1672, 7
    %v1674 = vsub.s32 %v1313, %v1673
    %v1675 = vrot.slane %v1622, %v1674
    %v1676 = vsel %vm1318, %v1675, %v1671
    %v1677 = vlaneseq
    %v1678 = vshrl.u32 %v1677, 7
    %v1679 = vsub.s32 %v1320, %v1678
    %v1680 = vrot.slane %v1625, %v1679
    %v1681 = vsel %vm1325, %v1680, %v1676
    %v1682 = vlaneseq
    %v1683 = vshrl.u32 %v1682, 7
    %v1684 = vsub.s32 %v1327, %v1683
    %v1685 = vrot.slane %v1628, %v1684
    %v1686 = vsel %vm1332, %v1685, %v1681
    %v1687 = vsel %vm1358, %v1686, %v1662
    %v1689 = vsel %vm1361, %v1687, 0.0
    %1690 = vadd.xlane.f32.xlu0 %v1689
    %v1691 = vpop.xlane.xlu0 %1690
    %vm1692 = vcmask 7168
    %v1693 = vsel %vm1692, %v1364, %v1473
    %vm1694 = vcmask 15360
    %v1695 = vsel %vm1694, %v1693, %v1582
    %vm1696 = vcmask 23552
    %v1697 = vsel %vm1696, %v1695, %v1691
    %v1698 = vld [vmem:[%s8] sm:$0x1]
    %v1700 = vlaneseq
    %v1701 = vshrl.u32 %v1700, 7
    %v1702 = vsub.s32 0, %v1701
    %v1703 = vrot.slane %v1698, %v1702
    %v1705 = vadd.f32 %v1697, %v1703
    %vm1706 = vcmask 25600
    %1707 = vst.msk [vmem:[#allocation5] sm:$0x3] %vm1706, %v1705
    // Predicated region
    $region38: #{dqn_forward.1} parent=1 // pred_check
      _
    $region39: #{dqn_forward.1} parent=1 // pred_check_branch
      %1709 = sbr.rel (0) target = $region41
    $region40: #{dqn_forward.1} parent=1 // pred_region
      %s1711 = ssub.s32 32, 32
      %1712 = vsyncadd [#allocation6], %s1711
      %s1714 = sshll.u32 [#allocation5], 4
      %s1715 = int_to_ptr.vmem [resolvable:$true] %s1714
      %1717 = dma.vmem_to_hbm [thread:$0]  %s1715, 32, %s9, [#allocation6]
    $region41: #{dqn_forward.1} parent=1 // pred_fallthru
      _
    // Predicated region
    $region42: #{dqn_forward.1} parent=1 // pred_check
      _
    $region43: #{dqn_forward.1} parent=1 // pred_check_branch
      %1719 = sbr.rel (0) target = $region45
    $region44: #{dqn_forward.1} parent=1 // pred_region
      %1720 = dma.done [#allocation6], 32
    $region45: #{dqn_forward.1} parent=1 // pred_fallthru
      _
    %1721 = vsyncpa [#allocation6], 1

</llo_original>
